<compile_context>
chip_gen: v5e
topology: v5e:2x2
jax: 0.10.0
libtpu: 0.0.40
codegen_flags: <defaults>
</compile_context>

<pallas_src>
import functools
import numpy as np

import jax
import jax.numpy as jnp
from jax.experimental import pallas as pl
from jax.experimental.pallas import tpu as pltpu

IGNORE_ID = -1

# ----------------- config (small, consistent with the module constructor) -----------------
TEXT_TOKEN_SIZE = 32
SPEECH_TOKEN_SIZE = 16
TEXT_ENC_INPUT = 32      # text_encoder_input_size == text encoder d_model == output_size()
LLM_INPUT = 32           # llm_input_size
LLM_OUTPUT = 32          # llm_output_size
SPK_EMBED_DIM = 192      # spk_embed_dim (module default)
N_HEAD = 4
HEAD_DIM = 8
FFN_DIM = 64
LSM_WEIGHT = 0.1         # label smoothing weight
LENGTH_NORMALIZED_LOSS = True

D_PAD = 128              # lane-dense padded hidden width (real width 32, pads are zero)
V_PAD = 128              # lane-dense padded vocab width (real V = speech_token_size + 1 = 17)

_LAYER_KEYS = ('ln1_g', 'ln1_b', 'wq', 'wk', 'wv', 'bq', 'bk', 'bv', 'wo', 'bo',
               'ln2_g', 'ln2_b', 'w1', 'b1', 'w2', 'b2', 'lnf_g', 'lnf_b')


def _layer_weights(p):
    return [p[k] for k in _LAYER_KEYS]


# ------------------------------ shared transformer-layer body ------------------------------

def _layer_core(x, bias, refs, *, n_head, head_dim, d_real, eps=1e-5):
    """Pre-LN transformer layer + final LN on an (L, D_PAD) f32 slab.

    Real hidden width is d_real; columns >= d_real are zero on input and stay zero
    (weights zero-padded, LN gammas/betas zero on padded columns).
    bias: (1, L) additive key-padding mask (0 valid / -1e9 masked), f32.
    """
    (ln1_g, ln1_b, wq, wk, wv, bq, bk, bv, wo, bo,
     ln2_g, ln2_b, w1, b1, w2, b2, lnf_g, lnf_b) = refs
    bf = jnp.bfloat16
    col_mask = (jax.lax.broadcasted_iota(jnp.int32, (1, x.shape[-1]), 1)
                < d_real).astype(jnp.float32)
    inv_d = 1.0 / float(d_real)

    def layer_norm(t, g_ref, b_ref):
        mu = jnp.sum(t, axis=-1, keepdims=True) * inv_d
        tc = (t - mu) * col_mask
        var = jnp.sum(tc * tc, axis=-1, keepdims=True) * inv_d
        return tc * jax.lax.rsqrt(var + eps) * g_ref[...] + b_ref[...]

    # ---- self-attention (1/sqrt(head_dim) is folded into wq/bq at init) ----
    h = layer_norm(x, ln1_g, ln1_b).astype(bf)
    q = jnp.dot(h, wq[...], preferred_element_type=jnp.float32) + bq[...]
    k = jnp.dot(h, wk[...], preferred_element_type=jnp.float32) + bk[...]
    v = jnp.dot(h, wv[...], preferred_element_type=jnp.float32) + bv[...]

    heads = []
    for hh in range(n_head):                 # static unroll over heads
        sl = slice(hh * head_dim, (hh + 1) * head_dim)
        # scores: contract the last (head_dim) axes directly -- no explicit k.T relayout
        s = jax.lax.dot_general(q[:, sl].astype(bf), k[:, sl].astype(bf),
                                (((1,), (1,)), ((), ())),
                                preferred_element_type=jnp.float32) + bias
        m = jnp.max(s, axis=-1, keepdims=True)
        p = jnp.exp(s - m)
        p = p * pl.reciprocal(jnp.sum(p, axis=-1, keepdims=True), approx=True)
        heads.append(jnp.dot(p.astype(bf), v[:, sl].astype(bf),
                             preferred_element_type=jnp.float32))
    attn = jnp.concatenate(heads, axis=-1)                        # (L, inner)
    # single hoisted Wo projection (K = inner, one MXU pass)
    x = x + jnp.dot(attn.astype(bf), wo[...],
                    preferred_element_type=jnp.float32) + bo[...]

    # ---- feed-forward ----
    h2 = layer_norm(x, ln2_g, ln2_b).astype(bf)
    ff = jnp.maximum(jnp.dot(h2, w1[...], preferred_element_type=jnp.float32)
                     + b1[...], 0.0)
    x = x + jnp.dot(ff.astype(bf), w2[...],
                    preferred_element_type=jnp.float32) + b2[...]

    return layer_norm(x, lnf_g, lnf_b)                            # (L, D_PAD) f32


# ------------------------------ kernel #1: text encoder + affine ---------------------------

def _text_encoder_kernel(lens_ref, x_ref,
                         ln1_g, ln1_b, wq, wk, wv, bq, bk, bv, wo, bo,
                         ln2_g, ln2_b, w1, b1, w2, b2, lnf_g, lnf_b,
                         pw, pb, o_ref, *, n_head, head_dim, d_real):
    b = pl.program_id(0)
    L = x_ref.shape[0]
    key_valid = jax.lax.broadcasted_iota(jnp.int32, (1, L), 1) < lens_ref[b]
    bias = jnp.where(key_valid, 0.0, -1e9)                        # (1, L) f32
    x = x_ref[...].astype(jnp.float32)
    refs = (ln1_g, ln1_b, wq, wk, wv, bq, bk, bv, wo, bo,
            ln2_g, ln2_b, w1, b1, w2, b2, lnf_g, lnf_b)
    hf = _layer_core(x, bias, refs, n_head=n_head, head_dim=head_dim, d_real=d_real)
    o_ref[...] = (jnp.dot(hf.astype(jnp.bfloat16), pw[...],
                          preferred_element_type=jnp.float32) + pb[...]
                  ).astype(o_ref.dtype)


def text_encoder_pallas(layer_p, x, lengths, pw, pb):
    """x: (B, L, D_PAD) bf16; lengths: (B,) int32. Returns (B, L, D_PAD) bf16."""
    B, L, Dp = x.shape
    weights = _layer_weights(layer_p) + [pw, pb]
    kernel = functools.partial(_text_encoder_kernel, n_head=N_HEAD, head_dim=HEAD_DIM,
                               d_real=TEXT_ENC_INPUT)
    grid_spec = pltpu.PrefetchScalarGridSpec(
        num_scalar_prefetch=1, grid=(B,),
        in_specs=([pl.BlockSpec((None, L, Dp), lambda b, lens: (b, 0, 0))]
                  + [pl.BlockSpec(w.shape, lambda b, lens: (0, 0)) for w in weights]),
        out_specs=pl.BlockSpec((None, L, Dp), lambda b, lens: (b, 0, 0)),
    )
    return pl.pallas_call(
        kernel,
        out_shape=jax.ShapeDtypeStruct((B, L, Dp), jnp.bfloat16),
        grid_spec=grid_spec,
        compiler_params=pltpu.CompilerParams(dimension_semantics=("parallel",)),
    )(lengths, x, *weights)


# ---------------- kernel #2: llm encoder + decoder head + fused loss / accuracy ------------

def _llm_loss_kernel(lens_ref, x_ref, tgt_ref,
                     ln1_g, ln1_b, wq, wk, wv, bq, bk, bv, wo, bo,
                     ln2_g, ln2_b, w1, b1, w2, b2, lnf_g, lnf_b,
                     pw, pb, o_ref, *, n_head, head_dim, d_real,
                     vocab, smoothing, ignore_id):
    b = pl.program_id(0)
    L = x_ref.shape[0]
    key_valid = jax.lax.broadcasted_iota(jnp.int32, (1, L), 1) < lens_ref[b]
    bias = jnp.where(key_valid, 0.0, -1e9)                        # (1, L) f32
    x = x_ref[...].astype(jnp.float32)
    refs = (ln1_g, ln1_b, wq, wk, wv, bq, bk, bv, wo, bo,
            ln2_g, ln2_b, w1, b1, w2, b2, lnf_g, lnf_b)
    hf = _layer_core(x, bias, refs, n_head=n_head, head_dim=head_dim, d_real=d_real)

    # logits stay in VMEM (fused loss), padded vocab columns are masked out below
    logits = jnp.dot(hf.astype(jnp.bfloat16), pw[...],
                     preferred_element_type=jnp.float32) + pb[...]           # (L, V_PAD)

    # ---- closed-form label-smoothing KL + accuracy (all f32) ----
    confidence = 1.0 - smoothing
    low = smoothing / (vocab - 1) if vocab > 1 else 0.0
    td_logtd = 0.0                                   # sum_v td*log(td): compile-time constant
    if confidence > 0.0:
        td_logtd += confidence * float(np.log(confidence))
    if low > 0.0:
        td_logtd += (vocab - 1) * low * float(np.log(low))

    tgt = tgt_ref[...]                                            # (L, 1) int32
    valid_row = tgt != ignore_id
    tgt_safe = jnp.where(valid_row, tgt, 0)
    cols = jax.lax.broadcasted_iota(jnp.int32, logits.shape, 1)
    vocab_mask = cols < vocab
    masked = jnp.where(vocab_mask, logits, -1e30)
    m = jnp.max(masked, axis=-1, keepdims=True)                   # (L, 1)
    sumexp = jnp.sum(jnp.where(vocab_mask, jnp.exp(logits - m), 0.0),
                     axis=-1, keepdims=True)
    lse = m + jnp.log(sumexp)                                     # (L, 1)
    logit_tgt = jnp.sum(jnp.where(cols == tgt_safe, logits, 0.0),
                        axis=-1, keepdims=True)                   # (L, 1)
    sum_logits = jnp.sum(jnp.where(vocab_mask, logits, 0.0),
                         axis=-1, keepdims=True)                  # (L, 1)
    # sum_v td*logp = (conf - low)*logp[target] + low*sum_v logp
    td_dot_logp = ((confidence - low) * (logit_tgt - lse)
                   + low * (sum_logits - float(vocab) * lse))
    kl_row = td_logtd - td_dot_logp                               # (L, 1)

    # th_accuracy: first-max argmax over the real vocab columns
    pred = jnp.min(jnp.where((masked == m) & vocab_mask, cols, vocab),
                   axis=-1, keepdims=True)                        # (L, 1)
    validf = valid_row.astype(jnp.float32)
    loss_sum = jnp.sum(kl_row * validf, axis=0, keepdims=True)                    # (1, 1)
    n_correct = jnp.sum(jnp.where(valid_row & (pred == tgt), 1.0, 0.0),
                        axis=0, keepdims=True)                                    # (1, 1)
    n_valid = jnp.sum(validf, axis=0, keepdims=True)                              # (1, 1)

    lane = jax.lax.broadcasted_iota(jnp.int32, o_ref.shape, 1)
    o_ref[...] = (jnp.where(lane == 0, loss_sum, 0.0)
                  + jnp.where(lane == 1, n_correct, 0.0)
                  + jnp.where(lane == 2, n_valid, 0.0))


def llm_with_loss_pallas(layer_p, lm_input, lengths, lm_target, pw, pb):
    """lm_input: (B, L, D_PAD) bf16; lm_target: (B, L, 1) int32. Returns (B, 1, 128) stats."""
    B, L, Dp = lm_input.shape
    weights = _layer_weights(layer_p) + [pw, pb]
    kernel = functools.partial(_llm_loss_kernel, n_head=N_HEAD, head_dim=HEAD_DIM,
                               d_real=LLM_INPUT, vocab=SPEECH_TOKEN_SIZE + 1,
                               smoothing=LSM_WEIGHT, ignore_id=IGNORE_ID)
    grid_spec = pltpu.PrefetchScalarGridSpec(
        num_scalar_prefetch=1, grid=(B,),
        in_specs=([pl.BlockSpec((None, L, Dp), lambda b, lens: (b, 0, 0)),
                   pl.BlockSpec((None, L, 1), lambda b, lens: (b, 0, 0))]
                  + [pl.BlockSpec(w.shape, lambda b, lens: (0, 0)) for w in weights]),
        out_specs=pl.BlockSpec((None, 1, 128), lambda b, lens: (b, 0, 0)),
    )
    return pl.pallas_call(
        kernel,
        out_shape=jax.ShapeDtypeStruct((B, 1, 128), jnp.float32),
        grid_spec=grid_spec,
        compiler_params=pltpu.CompilerParams(dimension_semantics=("parallel",)),
    )(lengths, lm_input, lm_target, *weights)


# ----------------------------------- parameter init ----------------------------------------

def _pad_to(a, rows, cols, dtype):
    out = np.zeros((rows, cols), np.float32)
    a = np.asarray(a, np.float32)
    out[:a.shape[0], :a.shape[1]] = a
    return jnp.asarray(out, dtype)


def init_encoder_layer(key, d_real, n_head, head_dim, ffn_dim):
    inner = n_head * head_dim
    ks = jax.random.split(key, 6)

    def rnd(k, i, o):
        return np.asarray(jax.random.normal(k, (i, o), jnp.float32)) * 0.02

    scale = 1.0 / float(np.sqrt(head_dim))         # attention scale folded into Q at init
    ones_d = np.ones((1, d_real), np.float32)
    zeros_d = np.zeros((1, d_real), np.float32)
    return dict(
        ln1_g=_pad_to(ones_d, 1, D_PAD, jnp.float32),
        ln1_b=_pad_to(zeros_d, 1, D_PAD, jnp.float32),
        wq=_pad_to(rnd(ks[0], d_real, inner) * scale, D_PAD, inner, jnp.bfloat16),
        wk=_pad_to(rnd(ks[1], d_real, inner), D_PAD, inner, jnp.bfloat16),
        wv=_pad_to(rnd(ks[2], d_real, inner), D_PAD, inner, jnp.bfloat16),
        bq=jnp.zeros((1, inner), jnp.float32),     # (scaled) query bias
        bk=jnp.zeros((1, inner), jnp.float32),
        bv=jnp.zeros((1, inner), jnp.float32),
        wo=_pad_to(rnd(ks[3], inner, d_real), inner, D_PAD, jnp.bfloat16),
        bo=jnp.zeros((1, D_PAD), jnp.float32),
        ln2_g=_pad_to(ones_d, 1, D_PAD, jnp.float32),
        ln2_b=_pad_to(zeros_d, 1, D_PAD, jnp.float32),
        w1=_pad_to(rnd(ks[4], d_real, ffn_dim), D_PAD, ffn_dim, jnp.bfloat16),
        b1=jnp.zeros((1, ffn_dim), jnp.float32),
        w2=_pad_to(rnd(ks[5], ffn_dim, d_real), ffn_dim, D_PAD, jnp.bfloat16),
        b2=jnp.zeros((1, D_PAD), jnp.float32),
        lnf_g=_pad_to(ones_d, 1, D_PAD, jnp.float32),
        lnf_b=_pad_to(zeros_d, 1, D_PAD, jnp.float32),
    )


def init_transformer_lm(key):
    ks = jax.random.split(key, 8)
    V = SPEECH_TOKEN_SIZE + 1

    def rnd(k, i, o):
        return np.asarray(jax.random.normal(k, (i, o), jnp.float32)) * 0.02

    return dict(
        text_embedding=_pad_to(rnd(ks[0], TEXT_TOKEN_SIZE, TEXT_ENC_INPUT),
                               TEXT_TOKEN_SIZE, D_PAD, jnp.bfloat16),
        text_encoder=init_encoder_layer(ks[1], TEXT_ENC_INPUT, N_HEAD, HEAD_DIM, FFN_DIM),
        text_affine_w=_pad_to(rnd(ks[2], TEXT_ENC_INPUT, LLM_INPUT),
                              D_PAD, D_PAD, jnp.bfloat16),
        text_affine_b=jnp.zeros((1, D_PAD), jnp.float32),
        llm_embedding=_pad_to(rnd(ks[3], 2, LLM_INPUT), 2, D_PAD, jnp.bfloat16),
        llm=init_encoder_layer(ks[4], LLM_INPUT, N_HEAD, HEAD_DIM, FFN_DIM),
        llm_decoder_w=_pad_to(rnd(ks[5], LLM_OUTPUT, V), D_PAD, V_PAD, jnp.bfloat16),
        llm_decoder_b=jnp.zeros((1, V_PAD), jnp.float32),
        speech_embedding=_pad_to(rnd(ks[6], SPEECH_TOKEN_SIZE, LLM_INPUT),
                                 SPEECH_TOKEN_SIZE, D_PAD, jnp.bfloat16),
        spk_affine_w=_pad_to(rnd(ks[7], SPK_EMBED_DIM, LLM_INPUT),
                             SPK_EMBED_DIM, D_PAD, jnp.bfloat16),
        spk_affine_b=jnp.zeros((1, D_PAD), jnp.float32),
    )


# --------------------------------- TransformerLM forward -----------------------------------

def transformer_lm_forward(params, batch):
    # Token ids / lengths are host numpy (concrete) -> all ragged bookkeeping is done on the
    # host BEFORE any device compute is launched; no mid-forward device->host sync.
    text_token = np.asarray(batch['text_token'])
    text_token_len = np.asarray(batch['text_token_len']).astype(np.int32)
    speech_token = np.asarray(batch['speech_token'])
    speech_token_len = np.asarray(batch['speech_token_len']).astype(np.int32)
    B, Lt = text_token.shape
    Ls = speech_token.shape[1]

    # Synthetic encoder does no subsampling -> encoder_out_lens == text_token_len.
    lm_input_len = (3 + text_token_len + speech_token_len).astype(np.int32)
    maxL = int(lm_input_len.max())

    # lm_target (host-side)
    lm_target_np = np.full((B, maxL), IGNORE_ID, np.int32)
    for i in range(B):
        tl, sl = int(text_token_len[i]), int(speech_token_len[i])
        lm_target_np[i, 2 + tl:2 + tl + sl] = speech_token[i, :sl]
        lm_target_np[i, 2 + tl + sl] = SPEECH_TOKEN_SIZE
    lm_target = jnp.asarray(lm_target_np.reshape(B, maxL, 1))

    # Host-precomputed gather indices replacing the per-sample concat/pad loop
    # (row 0 of the source table is the IGNORE_ID padding row, matching pad_sequence(-1)).
    OFF_SOS, OFF_TASK, OFF_SPK = 1, 2, 3
    OFF_TEXT = 3 + B
    OFF_SPEECH = OFF_TEXT + B * Lt
    idx_np = np.zeros((B, maxL), np.int32)
    for i in range(B):
        tl, sl = int(text_token_len[i]), int(speech_token_len[i])
        idx_np[i, 0] = OFF_SOS
        idx_np[i, 1] = OFF_SPK + i
        idx_np[i, 2:2 + tl] = OFF_TEXT + i * Lt + np.arange(tl)
        idx_np[i, 2 + tl] = OFF_TASK
        idx_np[i, 3 + tl:3 + tl + sl] = OFF_SPEECH + i * Ls + np.arange(sl)
    gather_idx = jnp.asarray(idx_np)

    # 1. text embedding + fused text encoder (+ text_encoder_affine head)  [pallas_call #1]
    text_emb = jnp.take(params['text_embedding'], jnp.asarray(text_token), axis=0)
    enc_out = text_encoder_pallas(params['text_encoder'], text_emb,
                                  jnp.asarray(text_token_len),
                                  params['text_affine_w'], params['text_affine_b'])

    # 2. speaker embedding: F.normalize(dim=1) + affine (tiny; left to XLA, no extra launch)
    emb = batch['embedding'].astype(jnp.float32)
    emb = emb / jnp.maximum(jnp.sqrt(jnp.sum(emb * emb, axis=1, keepdims=True)), 1e-12)
    spk = (jnp.dot(emb.astype(jnp.bfloat16), params['spk_affine_w'],
                   preferred_element_type=jnp.float32)
           + params['spk_affine_b']).astype(jnp.bfloat16)                      # (B, D_PAD)

    # 3. assemble lm_input with a single table gather (pad rows: -1 in real cols, 0 in pads)
    pad_row = jnp.concatenate(
        [jnp.full((1, LLM_INPUT), float(IGNORE_ID), jnp.bfloat16),
         jnp.zeros((1, D_PAD - LLM_INPUT), jnp.bfloat16)], axis=1)
    speech_emb = jnp.take(params['speech_embedding'], jnp.asarray(speech_token), axis=0)
    table = jnp.concatenate(
        [pad_row, params['llm_embedding'][0:1], params['llm_embedding'][1:2], spk,
         enc_out.reshape(B * Lt, D_PAD), speech_emb.reshape(B * Ls, D_PAD)], axis=0)
    lm_input = jnp.take(table, gather_idx, axis=0)                             # (B, maxL, D_PAD)

    # 4. fused llm encoder + llm_decoder head + label-smoothing CE + accuracy [pallas_call #2]
    stats = llm_with_loss_pallas(params['llm'], lm_input, jnp.asarray(lm_input_len),
                                 lm_target, params['llm_decoder_w'],
                                 params['llm_decoder_b'])
    stats = jnp.sum(stats, axis=0)                                             # (1, 128)
    loss_sum, n_correct, n_valid = stats[0, 0], stats[0, 1], stats[0, 2]
    denom = n_valid if LENGTH_NORMALIZED_LOSS else float(B)
    loss = loss_sum / denom
    acc = n_correct / jnp.maximum(n_valid, 1.0)
    return {'loss': loss, 'acc': acc}


# -------------------------------------------- main ------------------------------------------

if __name__ == "__main__":
    key = jax.random.PRNGKey(0)
    pk, k1, k2, k3 = jax.random.split(key, 4)
    params = init_transformer_lm(pk)

    B, Lt, Ls = 2, 6, 5
    text_token = np.asarray(
        jax.random.randint(k1, (B, Lt), 0, TEXT_TOKEN_SIZE, dtype=jnp.int32))
    speech_token = np.asarray(
        jax.random.randint(k2, (B, Ls), 0, SPEECH_TOKEN_SIZE, dtype=jnp.int32))
    batch = dict(
        text_token=text_token,
        text_token_len=np.array([6, 4], np.int32),
        speech_token=speech_token,
        speech_token_len=np.array([5, 3], np.int32),
        embedding=jax.random.normal(k3, (B, SPK_EMBED_DIM), jnp.float32),
    )

    out = transformer_lm_forward(params, batch)
    jax.block_until_ready(out['loss'])
    jax.block_until_ready(out['acc'])
    assert np.isfinite(float(out['loss'])) and np.isfinite(float(out['acc']))
    print("KERNEL_OK")
</pallas_src>

<mosaic_0001>
module attributes {stable_mosaic.version = 11 : i64} {
  func.func @_text_encoder_kernel(%arg0: i32, %arg1: memref<2xi32, #tpu.memory_space<smem>>, %arg2: memref<1x6x128xbf16, #tpu.memory_space<vmem>>, %arg3: memref<1x128xf32, #tpu.memory_space<vmem>>, %arg4: memref<1x128xf32, #tpu.memory_space<vmem>>, %arg5: memref<128x32xbf16, #tpu.memory_space<vmem>>, %arg6: memref<128x32xbf16, #tpu.memory_space<vmem>>, %arg7: memref<128x32xbf16, #tpu.memory_space<vmem>>, %arg8: memref<1x32xf32, #tpu.memory_space<vmem>>, %arg9: memref<1x32xf32, #tpu.memory_space<vmem>>, %arg10: memref<1x32xf32, #tpu.memory_space<vmem>>, %arg11: memref<32x128xbf16, #tpu.memory_space<vmem>>, %arg12: memref<1x128xf32, #tpu.memory_space<vmem>>, %arg13: memref<1x128xf32, #tpu.memory_space<vmem>>, %arg14: memref<1x128xf32, #tpu.memory_space<vmem>>, %arg15: memref<128x64xbf16, #tpu.memory_space<vmem>>, %arg16: memref<1x64xf32, #tpu.memory_space<vmem>>, %arg17: memref<64x128xbf16, #tpu.memory_space<vmem>>, %arg18: memref<1x128xf32, #tpu.memory_space<vmem>>, %arg19: memref<1x128xf32, #tpu.memory_space<vmem>>, %arg20: memref<1x128xf32, #tpu.memory_space<vmem>>, %arg21: memref<128x128xbf16, #tpu.memory_space<vmem>>, %arg22: memref<1x128xf32, #tpu.memory_space<vmem>>, %arg23: memref<1x6x128xbf16, #tpu.memory_space<vmem>>) attributes {dimension_semantics = [#tpu.dimension_semantics<parallel>], iteration_bounds = array<i64: 2>, scalar_prefetch = 1 : i64, scratch_operands = 0 : i64, tpu.core_type = #tpu.core_type<tc>, window_params = [{transform_indices = @transform_0, window_bounds = array<i64: 1, 6, 128>}, {pipeline_mode = #tpu.pipeline_mode<synchronous>, transform_indices = @transform_1, window_bounds = array<i64: 1, 128>}, {pipeline_mode = #tpu.pipeline_mode<synchronous>, transform_indices = @transform_2, window_bounds = array<i64: 1, 128>}, {pipeline_mode = #tpu.pipeline_mode<synchronous>, transform_indices = @transform_3, window_bounds = array<i64: 128, 32>}, {pipeline_mode = #tpu.pipeline_mode<synchronous>, transform_indices = @transform_4, window_bounds = array<i64: 128, 32>}, {pipeline_mode = #tpu.pipeline_mode<synchronous>, transform_indices = @transform_5, window_bounds = array<i64: 128, 32>}, {pipeline_mode = #tpu.pipeline_mode<synchronous>, transform_indices = @transform_6, window_bounds = array<i64: 1, 32>}, {pipeline_mode = #tpu.pipeline_mode<synchronous>, transform_indices = @transform_7, window_bounds = array<i64: 1, 32>}, {pipeline_mode = #tpu.pipeline_mode<synchronous>, transform_indices = @transform_8, window_bounds = array<i64: 1, 32>}, {pipeline_mode = #tpu.pipeline_mode<synchronous>, transform_indices = @transform_9, window_bounds = array<i64: 32, 128>}, {pipeline_mode = #tpu.pipeline_mode<synchronous>, transform_indices = @transform_10, window_bounds = array<i64: 1, 128>}, {pipeline_mode = #tpu.pipeline_mode<synchronous>, transform_indices = @transform_11, window_bounds = array<i64: 1, 128>}, {pipeline_mode = #tpu.pipeline_mode<synchronous>, transform_indices = @transform_12, window_bounds = array<i64: 1, 128>}, {pipeline_mode = #tpu.pipeline_mode<synchronous>, transform_indices = @transform_13, window_bounds = array<i64: 128, 64>}, {pipeline_mode = #tpu.pipeline_mode<synchronous>, transform_indices = @transform_14, window_bounds = array<i64: 1, 64>}, {pipeline_mode = #tpu.pipeline_mode<synchronous>, transform_indices = @transform_15, window_bounds = array<i64: 64, 128>}, {pipeline_mode = #tpu.pipeline_mode<synchronous>, transform_indices = @transform_16, window_bounds = array<i64: 1, 128>}, {pipeline_mode = #tpu.pipeline_mode<synchronous>, transform_indices = @transform_17, window_bounds = array<i64: 1, 128>}, {pipeline_mode = #tpu.pipeline_mode<synchronous>, transform_indices = @transform_18, window_bounds = array<i64: 1, 128>}, {pipeline_mode = #tpu.pipeline_mode<synchronous>, transform_indices = @transform_19, window_bounds = array<i64: 128, 128>}, {pipeline_mode = #tpu.pipeline_mode<synchronous>, transform_indices = @transform_20, window_bounds = array<i64: 1, 128>}, {transform_indices = @transform_21, window_bounds = array<i64: 1, 6, 128>}]} {
    %0 = tpu.iota {dimensions = array<i32: 1>} : vector<1x6xi32>
    %1 = arith.index_cast %arg0 : i32 to index
    %2 = memref.load %arg1[%1] : memref<2xi32, #tpu.memory_space<smem>>
    %3 = vector.broadcast %2 : i32 to vector<1x6xi32>
    %4 = arith.cmpi slt, %0, %3 : vector<1x6xi32>
    %cst = arith.constant 0.000000e+00 : f32
    %cst_0 = arith.constant -1.000000e+09 : f32
    %5 = vector.broadcast %cst : f32 to vector<1x6xf32>
    %6 = vector.broadcast %cst_0 : f32 to vector<1x6xf32>
    %7 = arith.select %4, %5, %6 : vector<1x6xi1>, vector<1x6xf32>
    %c0 = arith.constant 0 : index
    %c0_1 = arith.constant 0 : index
    %c0_2 = arith.constant 0 : index
    %8 = vector.load %arg2[%c0, %c0_1, %c0_2] : memref<1x6x128xbf16, #tpu.memory_space<vmem>>, vector<1x6x128xbf16>
    %9 = vector.shape_cast %8 : vector<1x6x128xbf16> to vector<6x128xbf16>
    %10 = arith.extf %9 : vector<6x128xbf16> to vector<6x128xf32>
    %11 = tpu.iota {dimensions = array<i32: 1>} : vector<1x128xi32>
    %c32_i32 = arith.constant 32 : i32
    %12 = vector.broadcast %c32_i32 : i32 to vector<1x128xi32>
    %13 = arith.cmpi slt, %11, %12 : vector<1x128xi32>
    %14 = arith.extui %13 : vector<1x128xi1> to vector<1x128xi32>
    %15 = arith.sitofp %14 : vector<1x128xi32> to vector<1x128xf32>
    %cst_3 = arith.constant dense<0.000000e+00> : vector<6xf32>
    %16 = vector.multi_reduction <add>, %10, %cst_3 [1] : vector<6x128xf32> to vector<6xf32>
    %17 = vector.shape_cast %16 : vector<6xf32> to vector<6x1xf32>
    %cst_4 = arith.constant 3.125000e-02 : f32
    %18 = vector.broadcast %cst_4 : f32 to vector<6x1xf32>
    %19 = arith.mulf %17, %18 : vector<6x1xf32>
    %20 = vector.broadcast %19 : vector<6x1xf32> to vector<6x128xf32>
    %21 = arith.subf %10, %20 : vector<6x128xf32>
    %22 = vector.broadcast %15 : vector<1x128xf32> to vector<6x128xf32>
    %23 = arith.mulf %21, %22 : vector<6x128xf32>
    %24 = arith.mulf %23, %23 : vector<6x128xf32>
    %cst_5 = arith.constant dense<0.000000e+00> : vector<6xf32>
    %25 = vector.multi_reduction <add>, %24, %cst_5 [1] : vector<6x128xf32> to vector<6xf32>
    %26 = vector.shape_cast %25 : vector<6xf32> to vector<6x1xf32>
    %cst_6 = arith.constant 3.125000e-02 : f32
    %27 = vector.broadcast %cst_6 : f32 to vector<6x1xf32>
    %28 = arith.mulf %26, %27 : vector<6x1xf32>
    %cst_7 = arith.constant 9.99999974E-6 : f32
    %29 = vector.broadcast %cst_7 : f32 to vector<6x1xf32>
    %30 = arith.addf %28, %29 : vector<6x1xf32>
    %31 = math.rsqrt %30 : vector<6x1xf32>
    %32 = vector.broadcast %31 : vector<6x1xf32> to vector<6x128xf32>
    %33 = arith.mulf %23, %32 : vector<6x128xf32>
    %c0_8 = arith.constant 0 : index
    %c0_9 = arith.constant 0 : index
    %34 = vector.load %arg3[%c0_8, %c0_9] : memref<1x128xf32, #tpu.memory_space<vmem>>, vector<1x128xf32>
    %35 = vector.broadcast %34 : vector<1x128xf32> to vector<6x128xf32>
    %36 = arith.mulf %33, %35 : vector<6x128xf32>
    %c0_10 = arith.constant 0 : index
    %c0_11 = arith.constant 0 : index
    %37 = vector.load %arg4[%c0_10, %c0_11] : memref<1x128xf32, #tpu.memory_space<vmem>>, vector<1x128xf32>
    %38 = vector.broadcast %37 : vector<1x128xf32> to vector<6x128xf32>
    %39 = arith.addf %36, %38 : vector<6x128xf32>
    %40 = arith.truncf %39 : vector<6x128xf32> to vector<6x128xbf16>
    %c0_12 = arith.constant 0 : index
    %c0_13 = arith.constant 0 : index
    %41 = vector.load %arg5[%c0_12, %c0_13] : memref<128x32xbf16, #tpu.memory_space<vmem>>, vector<128x32xbf16>
    %cst_14 = arith.constant dense<0.000000e+00> : vector<6x32xf32>
    %42 = tpu.matmul %40, %41, %cst_14 {dimension_numbers = #tpu.dot_dimension_numbers<[1], [0], [0], [1], [0, 0, 1, 1], [], []>} : vector<6x128xbf16>, vector<128x32xbf16>, vector<6x32xf32> -> vector<6x32xf32>
    %c0_15 = arith.constant 0 : index
    %c0_16 = arith.constant 0 : index
    %43 = vector.load %arg8[%c0_15, %c0_16] : memref<1x32xf32, #tpu.memory_space<vmem>>, vector<1x32xf32>
    %44 = vector.broadcast %43 : vector<1x32xf32> to vector<6x32xf32>
    %45 = arith.addf %42, %44 : vector<6x32xf32>
    %c0_17 = arith.constant 0 : index
    %c0_18 = arith.constant 0 : index
    %46 = vector.load %arg6[%c0_17, %c0_18] : memref<128x32xbf16, #tpu.memory_space<vmem>>, vector<128x32xbf16>
    %cst_19 = arith.constant dense<0.000000e+00> : vector<6x32xf32>
    %47 = tpu.matmul %40, %46, %cst_19 {dimension_numbers = #tpu.dot_dimension_numbers<[1], [0], [0], [1], [0, 0, 1, 1], [], []>} : vector<6x128xbf16>, vector<128x32xbf16>, vector<6x32xf32> -> vector<6x32xf32>
    %c0_20 = arith.constant 0 : index
    %c0_21 = arith.constant 0 : index
    %48 = vector.load %arg9[%c0_20, %c0_21] : memref<1x32xf32, #tpu.memory_space<vmem>>, vector<1x32xf32>
    %49 = vector.broadcast %48 : vector<1x32xf32> to vector<6x32xf32>
    %50 = arith.addf %47, %49 : vector<6x32xf32>
    %c0_22 = arith.constant 0 : index
    %c0_23 = arith.constant 0 : index
    %51 = vector.load %arg7[%c0_22, %c0_23] : memref<128x32xbf16, #tpu.memory_space<vmem>>, vector<128x32xbf16>
    %cst_24 = arith.constant dense<0.000000e+00> : vector<6x32xf32>
    %52 = tpu.matmul %40, %51, %cst_24 {dimension_numbers = #tpu.dot_dimension_numbers<[1], [0], [0], [1], [0, 0, 1, 1], [], []>} : vector<6x128xbf16>, vector<128x32xbf16>, vector<6x32xf32> -> vector<6x32xf32>
    %c0_25 = arith.constant 0 : index
    %c0_26 = arith.constant 0 : index
    %53 = vector.load %arg10[%c0_25, %c0_26] : memref<1x32xf32, #tpu.memory_space<vmem>>, vector<1x32xf32>
    %54 = vector.broadcast %53 : vector<1x32xf32> to vector<6x32xf32>
    %55 = arith.addf %52, %54 : vector<6x32xf32>
    %56 = vector.extract_strided_slice %45 {offsets = [0, 0], sizes = [6, 8], strides = [1, 1]} : vector<6x32xf32> to vector<6x8xf32>
    %57 = arith.truncf %56 : vector<6x8xf32> to vector<6x8xbf16>
    %58 = vector.extract_strided_slice %50 {offsets = [0, 0], sizes = [6, 8], strides = [1, 1]} : vector<6x32xf32> to vector<6x8xf32>
    %59 = arith.truncf %58 : vector<6x8xf32> to vector<6x8xbf16>
    %cst_27 = arith.constant dense<0.000000e+00> : vector<6x6xf32>
    %60 = tpu.matmul %57, %59, %cst_27 {dimension_numbers = #tpu.dot_dimension_numbers<[1], [1], [0], [0], [0, 0, 1, 0], [], []>} : vector<6x8xbf16>, vector<6x8xbf16>, vector<6x6xf32> -> vector<6x6xf32>
    %61 = vector.broadcast %7 : vector<1x6xf32> to vector<6x6xf32>
    %62 = arith.addf %60, %61 : vector<6x6xf32>
    %cst_28 = arith.constant dense<0xFF800000> : vector<6xf32>
    %63 = vector.multi_reduction <maximumf>, %62, %cst_28 [1] : vector<6x6xf32> to vector<6xf32>
    %64 = vector.shape_cast %63 : vector<6xf32> to vector<6x1xf32>
    %65 = vector.broadcast %64 : vector<6x1xf32> to vector<6x6xf32>
    %66 = arith.subf %62, %65 : vector<6x6xf32>
    %67 = math.exp %66 : vector<6x6xf32>
    %cst_29 = arith.constant dense<0.000000e+00> : vector<6xf32>
    %68 = vector.multi_reduction <add>, %67, %cst_29 [1] : vector<6x6xf32> to vector<6xf32>
    %69 = vector.shape_cast %68 : vector<6xf32> to vector<6x1xf32>
    %70 = tpu.reciprocal %69 {approx = true} : vector<6x1xf32> -> vector<6x1xf32>
    %71 = vector.broadcast %70 : vector<6x1xf32> to vector<6x6xf32>
    %72 = arith.mulf %67, %71 : vector<6x6xf32>
    %73 = arith.truncf %72 : vector<6x6xf32> to vector<6x6xbf16>
    %74 = vector.extract_strided_slice %55 {offsets = [0, 0], sizes = [6, 8], strides = [1, 1]} : vector<6x32xf32> to vector<6x8xf32>
    %75 = arith.truncf %74 : vector<6x8xf32> to vector<6x8xbf16>
    %cst_30 = arith.constant dense<0.000000e+00> : vector<6x8xf32>
    %76 = tpu.matmul %73, %75, %cst_30 {dimension_numbers = #tpu.dot_dimension_numbers<[1], [0], [0], [1], [0, 0, 1, 1], [], []>} : vector<6x6xbf16>, vector<6x8xbf16>, vector<6x8xf32> -> vector<6x8xf32>
    %77 = vector.extract_strided_slice %45 {offsets = [0, 8], sizes = [6, 8], strides = [1, 1]} : vector<6x32xf32> to vector<6x8xf32>
    %78 = arith.truncf %77 : vector<6x8xf32> to vector<6x8xbf16>
    %79 = vector.extract_strided_slice %50 {offsets = [0, 8], sizes = [6, 8], strides = [1, 1]} : vector<6x32xf32> to vector<6x8xf32>
    %80 = arith.truncf %79 : vector<6x8xf32> to vector<6x8xbf16>
    %cst_31 = arith.constant dense<0.000000e+00> : vector<6x6xf32>
    %81 = tpu.matmul %78, %80, %cst_31 {dimension_numbers = #tpu.dot_dimension_numbers<[1], [1], [0], [0], [0, 0, 1, 0], [], []>} : vector<6x8xbf16>, vector<6x8xbf16>, vector<6x6xf32> -> vector<6x6xf32>
    %82 = vector.broadcast %7 : vector<1x6xf32> to vector<6x6xf32>
    %83 = arith.addf %81, %82 : vector<6x6xf32>
    %cst_32 = arith.constant dense<0xFF800000> : vector<6xf32>
    %84 = vector.multi_reduction <maximumf>, %83, %cst_32 [1] : vector<6x6xf32> to vector<6xf32>
    %85 = vector.shape_cast %84 : vector<6xf32> to vector<6x1xf32>
    %86 = vector.broadcast %85 : vector<6x1xf32> to vector<6x6xf32>
    %87 = arith.subf %83, %86 : vector<6x6xf32>
    %88 = math.exp %87 : vector<6x6xf32>
    %cst_33 = arith.constant dense<0.000000e+00> : vector<6xf32>
    %89 = vector.multi_reduction <add>, %88, %cst_33 [1] : vector<6x6xf32> to vector<6xf32>
    %90 = vector.shape_cast %89 : vector<6xf32> to vector<6x1xf32>
    %91 = tpu.reciprocal %90 {approx = true} : vector<6x1xf32> -> vector<6x1xf32>
    %92 = vector.broadcast %91 : vector<6x1xf32> to vector<6x6xf32>
    %93 = arith.mulf %88, %92 : vector<6x6xf32>
    %94 = arith.truncf %93 : vector<6x6xf32> to vector<6x6xbf16>
    %95 = vector.extract_strided_slice %55 {offsets = [0, 8], sizes = [6, 8], strides = [1, 1]} : vector<6x32xf32> to vector<6x8xf32>
    %96 = arith.truncf %95 : vector<6x8xf32> to vector<6x8xbf16>
    %cst_34 = arith.constant dense<0.000000e+00> : vector<6x8xf32>
    %97 = tpu.matmul %94, %96, %cst_34 {dimension_numbers = #tpu.dot_dimension_numbers<[1], [0], [0], [1], [0, 0, 1, 1], [], []>} : vector<6x6xbf16>, vector<6x8xbf16>, vector<6x8xf32> -> vector<6x8xf32>
    %98 = vector.extract_strided_slice %45 {offsets = [0, 16], sizes = [6, 8], strides = [1, 1]} : vector<6x32xf32> to vector<6x8xf32>
    %99 = arith.truncf %98 : vector<6x8xf32> to vector<6x8xbf16>
    %100 = vector.extract_strided_slice %50 {offsets = [0, 16], sizes = [6, 8], strides = [1, 1]} : vector<6x32xf32> to vector<6x8xf32>
    %101 = arith.truncf %100 : vector<6x8xf32> to vector<6x8xbf16>
    %cst_35 = arith.constant dense<0.000000e+00> : vector<6x6xf32>
    %102 = tpu.matmul %99, %101, %cst_35 {dimension_numbers = #tpu.dot_dimension_numbers<[1], [1], [0], [0], [0, 0, 1, 0], [], []>} : vector<6x8xbf16>, vector<6x8xbf16>, vector<6x6xf32> -> vector<6x6xf32>
    %103 = vector.broadcast %7 : vector<1x6xf32> to vector<6x6xf32>
    %104 = arith.addf %102, %103 : vector<6x6xf32>
    %cst_36 = arith.constant dense<0xFF800000> : vector<6xf32>
    %105 = vector.multi_reduction <maximumf>, %104, %cst_36 [1] : vector<6x6xf32> to vector<6xf32>
    %106 = vector.shape_cast %105 : vector<6xf32> to vector<6x1xf32>
    %107 = vector.broadcast %106 : vector<6x1xf32> to vector<6x6xf32>
    %108 = arith.subf %104, %107 : vector<6x6xf32>
    %109 = math.exp %108 : vector<6x6xf32>
    %cst_37 = arith.constant dense<0.000000e+00> : vector<6xf32>
    %110 = vector.multi_reduction <add>, %109, %cst_37 [1] : vector<6x6xf32> to vector<6xf32>
    %111 = vector.shape_cast %110 : vector<6xf32> to vector<6x1xf32>
    %112 = tpu.reciprocal %111 {approx = true} : vector<6x1xf32> -> vector<6x1xf32>
    %113 = vector.broadcast %112 : vector<6x1xf32> to vector<6x6xf32>
    %114 = arith.mulf %109, %113 : vector<6x6xf32>
    %115 = arith.truncf %114 : vector<6x6xf32> to vector<6x6xbf16>
    %116 = vector.extract_strided_slice %55 {offsets = [0, 16], sizes = [6, 8], strides = [1, 1]} : vector<6x32xf32> to vector<6x8xf32>
    %117 = arith.truncf %116 : vector<6x8xf32> to vector<6x8xbf16>
    %cst_38 = arith.constant dense<0.000000e+00> : vector<6x8xf32>
    %118 = tpu.matmul %115, %117, %cst_38 {dimension_numbers = #tpu.dot_dimension_numbers<[1], [0], [0], [1], [0, 0, 1, 1], [], []>} : vector<6x6xbf16>, vector<6x8xbf16>, vector<6x8xf32> -> vector<6x8xf32>
    %119 = vector.extract_strided_slice %45 {offsets = [0, 24], sizes = [6, 8], strides = [1, 1]} : vector<6x32xf32> to vector<6x8xf32>
    %120 = arith.truncf %119 : vector<6x8xf32> to vector<6x8xbf16>
    %121 = vector.extract_strided_slice %50 {offsets = [0, 24], sizes = [6, 8], strides = [1, 1]} : vector<6x32xf32> to vector<6x8xf32>
    %122 = arith.truncf %121 : vector<6x8xf32> to vector<6x8xbf16>
    %cst_39 = arith.constant dense<0.000000e+00> : vector<6x6xf32>
    %123 = tpu.matmul %120, %122, %cst_39 {dimension_numbers = #tpu.dot_dimension_numbers<[1], [1], [0], [0], [0, 0, 1, 0], [], []>} : vector<6x8xbf16>, vector<6x8xbf16>, vector<6x6xf32> -> vector<6x6xf32>
    %124 = vector.broadcast %7 : vector<1x6xf32> to vector<6x6xf32>
    %125 = arith.addf %123, %124 : vector<6x6xf32>
    %cst_40 = arith.constant dense<0xFF800000> : vector<6xf32>
    %126 = vector.multi_reduction <maximumf>, %125, %cst_40 [1] : vector<6x6xf32> to vector<6xf32>
    %127 = vector.shape_cast %126 : vector<6xf32> to vector<6x1xf32>
    %128 = vector.broadcast %127 : vector<6x1xf32> to vector<6x6xf32>
    %129 = arith.subf %125, %128 : vector<6x6xf32>
    %130 = math.exp %129 : vector<6x6xf32>
    %cst_41 = arith.constant dense<0.000000e+00> : vector<6xf32>
    %131 = vector.multi_reduction <add>, %130, %cst_41 [1] : vector<6x6xf32> to vector<6xf32>
    %132 = vector.shape_cast %131 : vector<6xf32> to vector<6x1xf32>
    %133 = tpu.reciprocal %132 {approx = true} : vector<6x1xf32> -> vector<6x1xf32>
    %134 = vector.broadcast %133 : vector<6x1xf32> to vector<6x6xf32>
    %135 = arith.mulf %130, %134 : vector<6x6xf32>
    %136 = arith.truncf %135 : vector<6x6xf32> to vector<6x6xbf16>
    %137 = vector.extract_strided_slice %55 {offsets = [0, 24], sizes = [6, 8], strides = [1, 1]} : vector<6x32xf32> to vector<6x8xf32>
    %138 = arith.truncf %137 : vector<6x8xf32> to vector<6x8xbf16>
    %cst_42 = arith.constant dense<0.000000e+00> : vector<6x8xf32>
    %139 = tpu.matmul %136, %138, %cst_42 {dimension_numbers = #tpu.dot_dimension_numbers<[1], [0], [0], [1], [0, 0, 1, 1], [], []>} : vector<6x6xbf16>, vector<6x8xbf16>, vector<6x8xf32> -> vector<6x8xf32>
    %140 = tpu.concatenate %76, %97, %118, %139 in 1 : vector<6x8xf32>, vector<6x8xf32>, vector<6x8xf32>, vector<6x8xf32> -> vector<6x32xf32>
    %141 = arith.truncf %140 : vector<6x32xf32> to vector<6x32xbf16>
    %c0_43 = arith.constant 0 : index
    %c0_44 = arith.constant 0 : index
    %142 = vector.load %arg11[%c0_43, %c0_44] : memref<32x128xbf16, #tpu.memory_space<vmem>>, vector<32x128xbf16>
    %cst_45 = arith.constant dense<0.000000e+00> : vector<6x128xf32>
    %143 = tpu.matmul %141, %142, %cst_45 {dimension_numbers = #tpu.dot_dimension_numbers<[1], [0], [0], [1], [0, 0, 1, 1], [], []>} : vector<6x32xbf16>, vector<32x128xbf16>, vector<6x128xf32> -> vector<6x128xf32>
    %144 = arith.addf %10, %143 : vector<6x128xf32>
    %c0_46 = arith.constant 0 : index
    %c0_47 = arith.constant 0 : index
    %145 = vector.load %arg12[%c0_46, %c0_47] : memref<1x128xf32, #tpu.memory_space<vmem>>, vector<1x128xf32>
    %146 = vector.broadcast %145 : vector<1x128xf32> to vector<6x128xf32>
    %147 = arith.addf %144, %146 : vector<6x128xf32>
    %cst_48 = arith.constant dense<0.000000e+00> : vector<6xf32>
    %148 = vector.multi_reduction <add>, %147, %cst_48 [1] : vector<6x128xf32> to vector<6xf32>
    %149 = vector.shape_cast %148 : vector<6xf32> to vector<6x1xf32>
    %cst_49 = arith.constant 3.125000e-02 : f32
    %150 = vector.broadcast %cst_49 : f32 to vector<6x1xf32>
    %151 = arith.mulf %149, %150 : vector<6x1xf32>
    %152 = vector.broadcast %151 : vector<6x1xf32> to vector<6x128xf32>
    %153 = arith.subf %147, %152 : vector<6x128xf32>
    %154 = vector.broadcast %15 : vector<1x128xf32> to vector<6x128xf32>
    %155 = arith.mulf %153, %154 : vector<6x128xf32>
    %156 = arith.mulf %155, %155 : vector<6x128xf32>
    %cst_50 = arith.constant dense<0.000000e+00> : vector<6xf32>
    %157 = vector.multi_reduction <add>, %156, %cst_50 [1] : vector<6x128xf32> to vector<6xf32>
    %158 = vector.shape_cast %157 : vector<6xf32> to vector<6x1xf32>
    %cst_51 = arith.constant 3.125000e-02 : f32
    %159 = vector.broadcast %cst_51 : f32 to vector<6x1xf32>
    %160 = arith.mulf %158, %159 : vector<6x1xf32>
    %cst_52 = arith.constant 9.99999974E-6 : f32
    %161 = vector.broadcast %cst_52 : f32 to vector<6x1xf32>
    %162 = arith.addf %160, %161 : vector<6x1xf32>
    %163 = math.rsqrt %162 : vector<6x1xf32>
    %164 = vector.broadcast %163 : vector<6x1xf32> to vector<6x128xf32>
    %165 = arith.mulf %155, %164 : vector<6x128xf32>
    %c0_53 = arith.constant 0 : index
    %c0_54 = arith.constant 0 : index
    %166 = vector.load %arg13[%c0_53, %c0_54] : memref<1x128xf32, #tpu.memory_space<vmem>>, vector<1x128xf32>
    %167 = vector.broadcast %166 : vector<1x128xf32> to vector<6x128xf32>
    %168 = arith.mulf %165, %167 : vector<6x128xf32>
    %c0_55 = arith.constant 0 : index
    %c0_56 = arith.constant 0 : index
    %169 = vector.load %arg14[%c0_55, %c0_56] : memref<1x128xf32, #tpu.memory_space<vmem>>, vector<1x128xf32>
    %170 = vector.broadcast %169 : vector<1x128xf32> to vector<6x128xf32>
    %171 = arith.addf %168, %170 : vector<6x128xf32>
    %172 = arith.truncf %171 : vector<6x128xf32> to vector<6x128xbf16>
    %c0_57 = arith.constant 0 : index
    %c0_58 = arith.constant 0 : index
    %173 = vector.load %arg15[%c0_57, %c0_58] : memref<128x64xbf16, #tpu.memory_space<vmem>>, vector<128x64xbf16>
    %cst_59 = arith.constant dense<0.000000e+00> : vector<6x64xf32>
    %174 = tpu.matmul %172, %173, %cst_59 {dimension_numbers = #tpu.dot_dimension_numbers<[1], [0], [0], [1], [0, 0, 1, 1], [], []>} : vector<6x128xbf16>, vector<128x64xbf16>, vector<6x64xf32> -> vector<6x64xf32>
    %c0_60 = arith.constant 0 : index
    %c0_61 = arith.constant 0 : index
    %175 = vector.load %arg16[%c0_60, %c0_61] : memref<1x64xf32, #tpu.memory_space<vmem>>, vector<1x64xf32>
    %176 = vector.broadcast %175 : vector<1x64xf32> to vector<6x64xf32>
    %177 = arith.addf %174, %176 : vector<6x64xf32>
    %cst_62 = arith.constant 0.000000e+00 : f32
    %178 = vector.broadcast %cst_62 : f32 to vector<6x64xf32>
    %179 = arith.maximumf %177, %178 : vector<6x64xf32>
    %180 = arith.truncf %179 : vector<6x64xf32> to vector<6x64xbf16>
    %c0_63 = arith.constant 0 : index
    %c0_64 = arith.constant 0 : index
    %181 = vector.load %arg17[%c0_63, %c0_64] : memref<64x128xbf16, #tpu.memory_space<vmem>>, vector<64x128xbf16>
    %cst_65 = arith.constant dense<0.000000e+00> : vector<6x128xf32>
    %182 = tpu.matmul %180, %181, %cst_65 {dimension_numbers = #tpu.dot_dimension_numbers<[1], [0], [0], [1], [0, 0, 1, 1], [], []>} : vector<6x64xbf16>, vector<64x128xbf16>, vector<6x128xf32> -> vector<6x128xf32>
    %183 = arith.addf %147, %182 : vector<6x128xf32>
    %c0_66 = arith.constant 0 : index
    %c0_67 = arith.constant 0 : index
    %184 = vector.load %arg18[%c0_66, %c0_67] : memref<1x128xf32, #tpu.memory_space<vmem>>, vector<1x128xf32>
    %185 = vector.broadcast %184 : vector<1x128xf32> to vector<6x128xf32>
    %186 = arith.addf %183, %185 : vector<6x128xf32>
    %cst_68 = arith.constant dense<0.000000e+00> : vector<6xf32>
    %187 = vector.multi_reduction <add>, %186, %cst_68 [1] : vector<6x128xf32> to vector<6xf32>
    %188 = vector.shape_cast %187 : vector<6xf32> to vector<6x1xf32>
    %cst_69 = arith.constant 3.125000e-02 : f32
    %189 = vector.broadcast %cst_69 : f32 to vector<6x1xf32>
    %190 = arith.mulf %188, %189 : vector<6x1xf32>
    %191 = vector.broadcast %190 : vector<6x1xf32> to vector<6x128xf32>
    %192 = arith.subf %186, %191 : vector<6x128xf32>
    %193 = vector.broadcast %15 : vector<1x128xf32> to vector<6x128xf32>
    %194 = arith.mulf %192, %193 : vector<6x128xf32>
    %195 = arith.mulf %194, %194 : vector<6x128xf32>
    %cst_70 = arith.constant dense<0.000000e+00> : vector<6xf32>
    %196 = vector.multi_reduction <add>, %195, %cst_70 [1] : vector<6x128xf32> to vector<6xf32>
    %197 = vector.shape_cast %196 : vector<6xf32> to vector<6x1xf32>
    %cst_71 = arith.constant 3.125000e-02 : f32
    %198 = vector.broadcast %cst_71 : f32 to vector<6x1xf32>
    %199 = arith.mulf %197, %198 : vector<6x1xf32>
    %cst_72 = arith.constant 9.99999974E-6 : f32
    %200 = vector.broadcast %cst_72 : f32 to vector<6x1xf32>
    %201 = arith.addf %199, %200 : vector<6x1xf32>
    %202 = math.rsqrt %201 : vector<6x1xf32>
    %203 = vector.broadcast %202 : vector<6x1xf32> to vector<6x128xf32>
    %204 = arith.mulf %194, %203 : vector<6x128xf32>
    %c0_73 = arith.constant 0 : index
    %c0_74 = arith.constant 0 : index
    %205 = vector.load %arg19[%c0_73, %c0_74] : memref<1x128xf32, #tpu.memory_space<vmem>>, vector<1x128xf32>
    %206 = vector.broadcast %205 : vector<1x128xf32> to vector<6x128xf32>
    %207 = arith.mulf %204, %206 : vector<6x128xf32>
    %c0_75 = arith.constant 0 : index
    %c0_76 = arith.constant 0 : index
    %208 = vector.load %arg20[%c0_75, %c0_76] : memref<1x128xf32, #tpu.memory_space<vmem>>, vector<1x128xf32>
    %209 = vector.broadcast %208 : vector<1x128xf32> to vector<6x128xf32>
    %210 = arith.addf %207, %209 : vector<6x128xf32>
    %211 = arith.truncf %210 : vector<6x128xf32> to vector<6x128xbf16>
    %c0_77 = arith.constant 0 : index
    %c0_78 = arith.constant 0 : index
    %212 = vector.load %arg21[%c0_77, %c0_78] : memref<128x128xbf16, #tpu.memory_space<vmem>>, vector<128x128xbf16>
    %cst_79 = arith.constant dense<0.000000e+00> : vector<6x128xf32>
    %213 = tpu.matmul %211, %212, %cst_79 {dimension_numbers = #tpu.dot_dimension_numbers<[1], [0], [0], [1], [0, 0, 1, 1], [], []>} : vector<6x128xbf16>, vector<128x128xbf16>, vector<6x128xf32> -> vector<6x128xf32>
    %c0_80 = arith.constant 0 : index
    %c0_81 = arith.constant 0 : index
    %214 = vector.load %arg22[%c0_80, %c0_81] : memref<1x128xf32, #tpu.memory_space<vmem>>, vector<1x128xf32>
    %215 = vector.broadcast %214 : vector<1x128xf32> to vector<6x128xf32>
    %216 = arith.addf %213, %215 : vector<6x128xf32>
    %217 = arith.truncf %216 : vector<6x128xf32> to vector<6x128xbf16>
    %c0_82 = arith.constant 0 : index
    %c0_83 = arith.constant 0 : index
    %c0_84 = arith.constant 0 : index
    %218 = vector.load %arg23[%c0_82, %c0_83, %c0_84] : memref<1x6x128xbf16, #tpu.memory_space<vmem>>, vector<1x6x128xbf16>
    %219 = vector.shape_cast %218 : vector<1x6x128xbf16> to vector<6x128xbf16>
    %220 = vector.shape_cast %217 : vector<6x128xbf16> to vector<1x6x128xbf16>
    tpu.vector_store %arg23[%c0_82, %c0_83, %c0_84], %220 {strides = array<i32>} : memref<1x6x128xbf16, #tpu.memory_space<vmem>>, vector<1x6x128xbf16>,
    return
  }
  func.func @transform_0(%arg0: i32, %arg1: memref<2xi32, #tpu.memory_space<smem>>) -> (i32, i32, i32) {
    %c0_i32 = arith.constant 0 : i32
    %c0_i32_0 = arith.constant 0 : i32
    %c0_i32_1 = arith.constant 0 : i32
    return %arg0, %c0_i32, %c0_i32_0 : i32, i32, i32
  }
  func.func @transform_1(%arg0: i32, %arg1: memref<2xi32, #tpu.memory_space<smem>>) -> (i32, i32) {
    %c0_i32 = arith.constant 0 : i32
    %c0_i32_0 = arith.constant 0 : i32
    %c0_i32_1 = arith.constant 0 : i32
    return %c0_i32, %c0_i32_0 : i32, i32
  }
  func.func @transform_2(%arg0: i32, %arg1: memref<2xi32, #tpu.memory_space<smem>>) -> (i32, i32) {
    %c0_i32 = arith.constant 0 : i32
    %c0_i32_0 = arith.constant 0 : i32
    %c0_i32_1 = arith.constant 0 : i32
    return %c0_i32, %c0_i32_0 : i32, i32
  }
  func.func @transform_3(%arg0: i32, %arg1: memref<2xi32, #tpu.memory_space<smem>>) -> (i32, i32) {
    %c0_i32 = arith.constant 0 : i32
    %c0_i32_0 = arith.constant 0 : i32
    %c0_i32_1 = arith.constant 0 : i32
    return %c0_i32, %c0_i32_0 : i32, i32
  }
  func.func @transform_4(%arg0: i32, %arg1: memref<2xi32, #tpu.memory_space<smem>>) -> (i32, i32) {
    %c0_i32 = arith.constant 0 : i32
    %c0_i32_0 = arith.constant 0 : i32
    %c0_i32_1 = arith.constant 0 : i32
    return %c0_i32, %c0_i32_0 : i32, i32
  }
  func.func @transform_5(%arg0: i32, %arg1: memref<2xi32, #tpu.memory_space<smem>>) -> (i32, i32) {
    %c0_i32 = arith.constant 0 : i32
    %c0_i32_0 = arith.constant 0 : i32
    %c0_i32_1 = arith.constant 0 : i32
    return %c0_i32, %c0_i32_0 : i32, i32
  }
  func.func @transform_6(%arg0: i32, %arg1: memref<2xi32, #tpu.memory_space<smem>>) -> (i32, i32) {
    %c0_i32 = arith.constant 0 : i32
    %c0_i32_0 = arith.constant 0 : i32
    %c0_i32_1 = arith.constant 0 : i32
    return %c0_i32, %c0_i32_0 : i32, i32
  }
  func.func @transform_7(%arg0: i32, %arg1: memref<2xi32, #tpu.memory_space<smem>>) -> (i32, i32) {
    %c0_i32 = arith.constant 0 : i32
    %c0_i32_0 = arith.constant 0 : i32
    %c0_i32_1 = arith.constant 0 : i32
    return %c0_i32, %c0_i32_0 : i32, i32
  }
  func.func @transform_8(%arg0: i32, %arg1: memref<2xi32, #tpu.memory_space<smem>>) -> (i32, i32) {
    %c0_i32 = arith.constant 0 : i32
    %c0_i32_0 = arith.constant 0 : i32
    %c0_i32_1 = arith.constant 0 : i32
    return %c0_i32, %c0_i32_0 : i32, i32
  }
  func.func @transform_9(%arg0: i32, %arg1: memref<2xi32, #tpu.memory_space<smem>>) -> (i32, i32) {
    %c0_i32 = arith.constant 0 : i32
    %c0_i32_0 = arith.constant 0 : i32
    %c0_i32_1 = arith.constant 0 : i32
    return %c0_i32, %c0_i32_0 : i32, i32
  }
  func.func @transform_10(%arg0: i32, %arg1: memref<2xi32, #tpu.memory_space<smem>>) -> (i32, i32) {
    %c0_i32 = arith.constant 0 : i32
    %c0_i32_0 = arith.constant 0 : i32
    %c0_i32_1 = arith.constant 0 : i32
    return %c0_i32, %c0_i32_0 : i32, i32
  }
  func.func @transform_11(%arg0: i32, %arg1: memref<2xi32, #tpu.memory_space<smem>>) -> (i32, i32) {
    %c0_i32 = arith.constant 0 : i32
    %c0_i32_0 = arith.constant 0 : i32
    %c0_i32_1 = arith.constant 0 : i32
    return %c0_i32, %c0_i32_0 : i32, i32
  }
  func.func @transform_12(%arg0: i32, %arg1: memref<2xi32, #tpu.memory_space<smem>>) -> (i32, i32) {
    %c0_i32 = arith.constant 0 : i32
    %c0_i32_0 = arith.constant 0 : i32
    %c0_i32_1 = arith.constant 0 : i32
    return %c0_i32, %c0_i32_0 : i32, i32
  }
  func.func @transform_13(%arg0: i32, %arg1: memref<2xi32, #tpu.memory_space<smem>>) -> (i32, i32) {
    %c0_i32 = arith.constant 0 : i32
    %c0_i32_0 = arith.constant 0 : i32
    %c0_i32_1 = arith.constant 0 : i32
    return %c0_i32, %c0_i32_0 : i32, i32
  }
  func.func @transform_14(%arg0: i32, %arg1: memref<2xi32, #tpu.memory_space<smem>>) -> (i32, i32) {
    %c0_i32 = arith.constant 0 : i32
    %c0_i32_0 = arith.constant 0 : i32
    %c0_i32_1 = arith.constant 0 : i32
    return %c0_i32, %c0_i32_0 : i32, i32
  }
  func.func @transform_15(%arg0: i32, %arg1: memref<2xi32, #tpu.memory_space<smem>>) -> (i32, i32) {
    %c0_i32 = arith.constant 0 : i32
    %c0_i32_0 = arith.constant 0 : i32
    %c0_i32_1 = arith.constant 0 : i32
    return %c0_i32, %c0_i32_0 : i32, i32
  }
  func.func @transform_16(%arg0: i32, %arg1: memref<2xi32, #tpu.memory_space<smem>>) -> (i32, i32) {
    %c0_i32 = arith.constant 0 : i32
    %c0_i32_0 = arith.constant 0 : i32
    %c0_i32_1 = arith.constant 0 : i32
    return %c0_i32, %c0_i32_0 : i32, i32
  }
  func.func @transform_17(%arg0: i32, %arg1: memref<2xi32, #tpu.memory_space<smem>>) -> (i32, i32) {
    %c0_i32 = arith.constant 0 : i32
    %c0_i32_0 = arith.constant 0 : i32
    %c0_i32_1 = arith.constant 0 : i32
    return %c0_i32, %c0_i32_0 : i32, i32
  }
  func.func @transform_18(%arg0: i32, %arg1: memref<2xi32, #tpu.memory_space<smem>>) -> (i32, i32) {
    %c0_i32 = arith.constant 0 : i32
    %c0_i32_0 = arith.constant 0 : i32
    %c0_i32_1 = arith.constant 0 : i32
    return %c0_i32, %c0_i32_0 : i32, i32
  }
  func.func @transform_19(%arg0: i32, %arg1: memref<2xi32, #tpu.memory_space<smem>>) -> (i32, i32) {
    %c0_i32 = arith.constant 0 : i32
    %c0_i32_0 = arith.constant 0 : i32
    %c0_i32_1 = arith.constant 0 : i32
    return %c0_i32, %c0_i32_0 : i32, i32
  }
  func.func @transform_20(%arg0: i32, %arg1: memref<2xi32, #tpu.memory_space<smem>>) -> (i32, i32) {
    %c0_i32 = arith.constant 0 : i32
    %c0_i32_0 = arith.constant 0 : i32
    %c0_i32_1 = arith.constant 0 : i32
    return %c0_i32, %c0_i32_0 : i32, i32
  }
  func.func @transform_21(%arg0: i32, %arg1: memref<2xi32, #tpu.memory_space<smem>>) -> (i32, i32, i32) {
    %c0_i32 = arith.constant 0 : i32
    %c0_i32_0 = arith.constant 0 : i32
    %c0_i32_1 = arith.constant 0 : i32
    return %arg0, %c0_i32, %c0_i32_0 : i32, i32, i32
  }
}

</mosaic_0001>

<llo_original>
// kernel: tpu_custom_call.1
$region0: #{tpu_custom_call.1}
  #allocation0 [shape = 'u32[]', space=smem, size = 0x4, offset = 0x4, fixed_abs, tag = 'smem constant byte address 0x4 - core index']
  #allocation1 [shape = 'u32[72,128]{1,0:T(1,128)}', space=vmem, size = 0x9000, scoped, tag = 'internal scratch']
  #allocation2 [shape = 's32[1]{0}', space=sflag, size = 0x4, scoped, tag = 'scoped memory for tpu_custom_call.1']
  #allocation3 [shape = 'u8[512]{0}', space=smem, size = 0x200, scoped, tag = 'prefetched SMEM operand 0']
  %s0 = inlined_call_operand.vmem [shape: s32[2], index: 0, kind: input, shape index: {}]
  %s1 = inlined_call_operand.vmem [shape: bf16[2,6,128], index: 1, kind: input, shape index: {}]
  %s2 = inlined_call_operand.vmem [shape: f32[1,128], index: 2, kind: input, shape index: {}]
  %s3 = inlined_call_operand.vmem [shape: f32[1,128], index: 3, kind: input, shape index: {}]
  %s4 = inlined_call_operand.vmem [shape: bf16[128,32], index: 4, kind: input, shape index: {}]
  %s5 = inlined_call_operand.vmem [shape: bf16[128,32], index: 5, kind: input, shape index: {}]
  %s6 = inlined_call_operand.vmem [shape: bf16[128,32], index: 6, kind: input, shape index: {}]
  %s7 = inlined_call_operand.vmem [shape: f32[1,32], index: 7, kind: input, shape index: {}]
  %s8 = inlined_call_operand.vmem [shape: f32[1,32], index: 8, kind: input, shape index: {}]
  %s9 = inlined_call_operand.vmem [shape: f32[1,32], index: 9, kind: input, shape index: {}]
  %s10 = inlined_call_operand.vmem [shape: bf16[32,128], index: 10, kind: input, shape index: {}]
  %s11 = inlined_call_operand.vmem [shape: f32[1,128], index: 11, kind: input, shape index: {}]
  %s12 = inlined_call_operand.vmem [shape: f32[1,128], index: 12, kind: input, shape index: {}]
  %s13 = inlined_call_operand.vmem [shape: f32[1,128], index: 13, kind: input, shape index: {}]
  %s14 = inlined_call_operand.vmem [shape: bf16[128,64], index: 14, kind: input, shape index: {}]
  %s15 = inlined_call_operand.vmem [shape: f32[1,64], index: 15, kind: input, shape index: {}]
  %s16 = inlined_call_operand.vmem [shape: bf16[64,128], index: 16, kind: input, shape index: {}]
  %s17 = inlined_call_operand.vmem [shape: f32[1,128], index: 17, kind: input, shape index: {}]
  %s18 = inlined_call_operand.vmem [shape: f32[1,128], index: 18, kind: input, shape index: {}]
  %s19 = inlined_call_operand.vmem [shape: f32[1,128], index: 19, kind: input, shape index: {}]
  %s20 = inlined_call_operand.vmem [shape: bf16[128,128], index: 20, kind: input, shape index: {}]
  %s21 = inlined_call_operand.vmem [shape: f32[1,128], index: 21, kind: input, shape index: {}]
  %s22 = inlined_call_operand.vmem [shape: bf16[2,6,128], index: 22, kind: output, shape index: {}]
  %s23 = sld [smem:[#allocation0]]
  $region117: #{tpu_custom_call.1} parent=0
    _
  %s25 = ssub.s32 1, %s23
  %s26 = scalar_select 0, %s25, %s23
  %s28 = sshll.u32 %s0, 4
  %s29 = int_to_ptr.vmem [resolvable:$true] %s28
  %31 = dma.vmem_to_smem %s29, 16, [#allocation3], [#allocation2]
  %33 = dma.done [#allocation2], 16
  %34 = sfence
  loop: start=0, step=1, limit=4
  $region2: #{tpu_custom_call.1} parent=0 // loop_pre_header
    _
  $region3: #{tpu_custom_call.1} parent=0 // loop_header
    %s36 = sphi 0, %s40
    %p37 = scmp.ge.s32.totalorder %s36, 4
    %s46 = sphi 0, %s48
    %s49 = sphi 0, %s46
    %s50 = sphi 0, %s49
    %s66 = sphi 0, %s50
    %s70 = sphi 0, %s70
    %s72 = sphi 0, %s70
    %s73 = sphi 0, %s72
    %s87 = sphi 0, %s73
    %s91 = sphi 0, %s91
    %s93 = sphi 0, %s91
    %s94 = sphi 0, %s93
    %s108 = sphi 0, %s94
    %s112 = sphi 0, %s112
    %s114 = sphi 0, %s112
    %s115 = sphi 0, %s114
    %s129 = sphi 0, %s115
    %s133 = sphi 0, %s133
    %s135 = sphi 0, %s133
    %s136 = sphi 0, %s135
    %s150 = sphi 0, %s136
    %s154 = sphi 0, %s154
    %s156 = sphi 0, %s154
    %s157 = sphi 0, %s156
    %s171 = sphi 0, %s157
    %s175 = sphi 0, %s175
    %s177 = sphi 0, %s175
    %s178 = sphi 0, %s177
    %s192 = sphi 0, %s178
    %s196 = sphi 0, %s196
    %s198 = sphi 0, %s196
    %s199 = sphi 0, %s198
    %s213 = sphi 0, %s199
    %s217 = sphi 0, %s217
    %s219 = sphi 0, %s217
    %s220 = sphi 0, %s219
    %s234 = sphi 0, %s220
    %s238 = sphi 0, %s238
    %s240 = sphi 0, %s238
    %s241 = sphi 0, %s240
    %s255 = sphi 0, %s241
    %s259 = sphi 0, %s259
    %s261 = sphi 0, %s259
    %s262 = sphi 0, %s261
    %s276 = sphi 0, %s262
    %s280 = sphi 0, %s280
    %s282 = sphi 0, %s280
    %s283 = sphi 0, %s282
    %s297 = sphi 0, %s283
    %s301 = sphi 0, %s301
    %s303 = sphi 0, %s301
    %s304 = sphi 0, %s303
    %s318 = sphi 0, %s304
    %s322 = sphi 0, %s322
    %s324 = sphi 0, %s322
    %s325 = sphi 0, %s324
    %s339 = sphi 0, %s325
    %s343 = sphi 0, %s343
    %s345 = sphi 0, %s343
    %s346 = sphi 0, %s345
    %s360 = sphi 0, %s346
    %s364 = sphi 0, %s364
    %s366 = sphi 0, %s364
    %s367 = sphi 0, %s366
    %s381 = sphi 0, %s367
    %s385 = sphi 0, %s385
    %s387 = sphi 0, %s385
    %s388 = sphi 0, %s387
    %s402 = sphi 0, %s388
    %s406 = sphi 0, %s406
    %s408 = sphi 0, %s406
    %s409 = sphi 0, %s408
    %s423 = sphi 0, %s409
    %s427 = sphi 0, %s427
    %s429 = sphi 0, %s427
    %s430 = sphi 0, %s429
    %s444 = sphi 0, %s430
    %s448 = sphi 0, %s448
    %s450 = sphi 0, %s448
    %s451 = sphi 0, %s450
    %s465 = sphi 0, %s451
    %s469 = sphi 0, %s469
    %s471 = sphi 0, %s469
    %s472 = sphi 0, %s471
    %s486 = sphi 0, %s472
    %s492 = sphi 0, %s494
    %s495 = sphi 0, %s492
    %s496 = sphi 0, %s495
    %s512 = sphi 0, %s496
  $region4: #{tpu_custom_call.1} parent=0 // loop_header_branch
    %39 = sbr.rel (%p37) target = $region8
  $region5: #{tpu_custom_call.1} parent=0 // loop_body
    %s41 = ssub.s32 %s36, 1
    %s42 = ssub.s32 %s36, 2
    %s43 = sadd.s32 %s36, 1
    %s44 = ssub.s32 %s36, %s43
    %p45 = scmp.eq.s32.totalorder %s44, 0
    %s47 = sadd.s32 %s46, 1
    %s48 = scalar_select %p45, %s46, %s47
    %p51 = pneg %p45
    %p52 = scmp.eq.s32.totalorder %s36, 1
    %p53 = por %p51, %p52
    %p54 = scmp.ne.s32.totalorder %s46, %s49
    %p55 = scmp.eq.s32.totalorder %s36, 0
    %p56 = por %p54, %p55
    %p57 = scmp.ne.s32.totalorder %s46, %s49
    %p58 = scmp.eq.s32.totalorder %s41, 1
    %p59 = por %p57, %p58
    %p60 = scmp.ne.s32.totalorder %s49, %s50
    %p61 = scmp.eq.s32.totalorder %s41, 0
    %p62 = por %p60, %p61
    %p63 = scmp.ne.s32.totalorder %s49, %s50
    %p64 = scmp.eq.s32.totalorder %s42, 1
    %p65 = por %p63, %p64
    %p67 = scmp.ne.s32.totalorder %s50, %s66
    %p68 = scmp.eq.s32.totalorder %s42, 0
    %p69 = por %p67, %p68
    %s71 = sadd.s32 %s70, 1
    %p74 = scmp.eq.s32.totalorder %s36, 1
    %p75 = scmp.ne.s32.totalorder %s70, %s72
    %p76 = scmp.eq.s32.totalorder %s36, 0
    %p77 = por %p75, %p76
    %p78 = scmp.ne.s32.totalorder %s70, %s72
    %p79 = scmp.eq.s32.totalorder %s41, 1
    %p80 = por %p78, %p79
    %p81 = scmp.ne.s32.totalorder %s72, %s73
    %p82 = scmp.eq.s32.totalorder %s41, 0
    %p83 = por %p81, %p82
    %p84 = scmp.ne.s32.totalorder %s72, %s73
    %p85 = scmp.eq.s32.totalorder %s42, 1
    %p86 = por %p84, %p85
    %p88 = scmp.ne.s32.totalorder %s73, %s87
    %p89 = scmp.eq.s32.totalorder %s42, 0
    %p90 = por %p88, %p89
    %s92 = sadd.s32 %s91, 1
    %p95 = scmp.eq.s32.totalorder %s36, 1
    %p96 = scmp.ne.s32.totalorder %s91, %s93
    %p97 = scmp.eq.s32.totalorder %s36, 0
    %p98 = por %p96, %p97
    %p99 = scmp.ne.s32.totalorder %s91, %s93
    %p100 = scmp.eq.s32.totalorder %s41, 1
    %p101 = por %p99, %p100
    %p102 = scmp.ne.s32.totalorder %s93, %s94
    %p103 = scmp.eq.s32.totalorder %s41, 0
    %p104 = por %p102, %p103
    %p105 = scmp.ne.s32.totalorder %s93, %s94
    %p106 = scmp.eq.s32.totalorder %s42, 1
    %p107 = por %p105, %p106
    %p109 = scmp.ne.s32.totalorder %s94, %s108
    %p110 = scmp.eq.s32.totalorder %s42, 0
    %p111 = por %p109, %p110
    %s113 = sadd.s32 %s112, 1
    %p116 = scmp.eq.s32.totalorder %s36, 1
    %p117 = scmp.ne.s32.totalorder %s112, %s114
    %p118 = scmp.eq.s32.totalorder %s36, 0
    %p119 = por %p117, %p118
    %p120 = scmp.ne.s32.totalorder %s112, %s114
    %p121 = scmp.eq.s32.totalorder %s41, 1
    %p122 = por %p120, %p121
    %p123 = scmp.ne.s32.totalorder %s114, %s115
    %p124 = scmp.eq.s32.totalorder %s41, 0
    %p125 = por %p123, %p124
    %p126 = scmp.ne.s32.totalorder %s114, %s115
    %p127 = scmp.eq.s32.totalorder %s42, 1
    %p128 = por %p126, %p127
    %p130 = scmp.ne.s32.totalorder %s115, %s129
    %p131 = scmp.eq.s32.totalorder %s42, 0
    %p132 = por %p130, %p131
    %s134 = sadd.s32 %s133, 1
    %p137 = scmp.eq.s32.totalorder %s36, 1
    %p138 = scmp.ne.s32.totalorder %s133, %s135
    %p139 = scmp.eq.s32.totalorder %s36, 0
    %p140 = por %p138, %p139
    %p141 = scmp.ne.s32.totalorder %s133, %s135
    %p142 = scmp.eq.s32.totalorder %s41, 1
    %p143 = por %p141, %p142
    %p144 = scmp.ne.s32.totalorder %s135, %s136
    %p145 = scmp.eq.s32.totalorder %s41, 0
    %p146 = por %p144, %p145
    %p147 = scmp.ne.s32.totalorder %s135, %s136
    %p148 = scmp.eq.s32.totalorder %s42, 1
    %p149 = por %p147, %p148
    %p151 = scmp.ne.s32.totalorder %s136, %s150
    %p152 = scmp.eq.s32.totalorder %s42, 0
    %p153 = por %p151, %p152
    %s155 = sadd.s32 %s154, 1
    %p158 = scmp.eq.s32.totalorder %s36, 1
    %p159 = scmp.ne.s32.totalorder %s154, %s156
    %p160 = scmp.eq.s32.totalorder %s36, 0
    %p161 = por %p159, %p160
    %p162 = scmp.ne.s32.totalorder %s154, %s156
    %p163 = scmp.eq.s32.totalorder %s41, 1
    %p164 = por %p162, %p163
    %p165 = scmp.ne.s32.totalorder %s156, %s157
    %p166 = scmp.eq.s32.totalorder %s41, 0
    %p167 = por %p165, %p166
    %p168 = scmp.ne.s32.totalorder %s156, %s157
    %p169 = scmp.eq.s32.totalorder %s42, 1
    %p170 = por %p168, %p169
    %p172 = scmp.ne.s32.totalorder %s157, %s171
    %p173 = scmp.eq.s32.totalorder %s42, 0
    %p174 = por %p172, %p173
    %s176 = sadd.s32 %s175, 1
    %p179 = scmp.eq.s32.totalorder %s36, 1
    %p180 = scmp.ne.s32.totalorder %s175, %s177
    %p181 = scmp.eq.s32.totalorder %s36, 0
    %p182 = por %p180, %p181
    %p183 = scmp.ne.s32.totalorder %s175, %s177
    %p184 = scmp.eq.s32.totalorder %s41, 1
    %p185 = por %p183, %p184
    %p186 = scmp.ne.s32.totalorder %s177, %s178
    %p187 = scmp.eq.s32.totalorder %s41, 0
    %p188 = por %p186, %p187
    %p189 = scmp.ne.s32.totalorder %s177, %s178
    %p190 = scmp.eq.s32.totalorder %s42, 1
    %p191 = por %p189, %p190
    %p193 = scmp.ne.s32.totalorder %s178, %s192
    %p194 = scmp.eq.s32.totalorder %s42, 0
    %p195 = por %p193, %p194
    %s197 = sadd.s32 %s196, 1
    %p200 = scmp.eq.s32.totalorder %s36, 1
    %p201 = scmp.ne.s32.totalorder %s196, %s198
    %p202 = scmp.eq.s32.totalorder %s36, 0
    %p203 = por %p201, %p202
    %p204 = scmp.ne.s32.totalorder %s196, %s198
    %p205 = scmp.eq.s32.totalorder %s41, 1
    %p206 = por %p204, %p205
    %p207 = scmp.ne.s32.totalorder %s198, %s199
    %p208 = scmp.eq.s32.totalorder %s41, 0
    %p209 = por %p207, %p208
    %p210 = scmp.ne.s32.totalorder %s198, %s199
    %p211 = scmp.eq.s32.totalorder %s42, 1
    %p212 = por %p210, %p211
    %p214 = scmp.ne.s32.totalorder %s199, %s213
    %p215 = scmp.eq.s32.totalorder %s42, 0
    %p216 = por %p214, %p215
    %s218 = sadd.s32 %s217, 1
    %p221 = scmp.eq.s32.totalorder %s36, 1
    %p222 = scmp.ne.s32.totalorder %s217, %s219
    %p223 = scmp.eq.s32.totalorder %s36, 0
    %p224 = por %p222, %p223
    %p225 = scmp.ne.s32.totalorder %s217, %s219
    %p226 = scmp.eq.s32.totalorder %s41, 1
    %p227 = por %p225, %p226
    %p228 = scmp.ne.s32.totalorder %s219, %s220
    %p229 = scmp.eq.s32.totalorder %s41, 0
    %p230 = por %p228, %p229
    %p231 = scmp.ne.s32.totalorder %s219, %s220
    %p232 = scmp.eq.s32.totalorder %s42, 1
    %p233 = por %p231, %p232
    %p235 = scmp.ne.s32.totalorder %s220, %s234
    %p236 = scmp.eq.s32.totalorder %s42, 0
    %p237 = por %p235, %p236
    %s239 = sadd.s32 %s238, 1
    %p242 = scmp.eq.s32.totalorder %s36, 1
    %p243 = scmp.ne.s32.totalorder %s238, %s240
    %p244 = scmp.eq.s32.totalorder %s36, 0
    %p245 = por %p243, %p244
    %p246 = scmp.ne.s32.totalorder %s238, %s240
    %p247 = scmp.eq.s32.totalorder %s41, 1
    %p248 = por %p246, %p247
    %p249 = scmp.ne.s32.totalorder %s240, %s241
    %p250 = scmp.eq.s32.totalorder %s41, 0
    %p251 = por %p249, %p250
    %p252 = scmp.ne.s32.totalorder %s240, %s241
    %p253 = scmp.eq.s32.totalorder %s42, 1
    %p254 = por %p252, %p253
    %p256 = scmp.ne.s32.totalorder %s241, %s255
    %p257 = scmp.eq.s32.totalorder %s42, 0
    %p258 = por %p256, %p257
    %s260 = sadd.s32 %s259, 1
    %p263 = scmp.eq.s32.totalorder %s36, 1
    %p264 = scmp.ne.s32.totalorder %s259, %s261
    %p265 = scmp.eq.s32.totalorder %s36, 0
    %p266 = por %p264, %p265
    %p267 = scmp.ne.s32.totalorder %s259, %s261
    %p268 = scmp.eq.s32.totalorder %s41, 1
    %p269 = por %p267, %p268
    %p270 = scmp.ne.s32.totalorder %s261, %s262
    %p271 = scmp.eq.s32.totalorder %s41, 0
    %p272 = por %p270, %p271
    %p273 = scmp.ne.s32.totalorder %s261, %s262
    %p274 = scmp.eq.s32.totalorder %s42, 1
    %p275 = por %p273, %p274
    %p277 = scmp.ne.s32.totalorder %s262, %s276
    %p278 = scmp.eq.s32.totalorder %s42, 0
    %p279 = por %p277, %p278
    %s281 = sadd.s32 %s280, 1
    %p284 = scmp.eq.s32.totalorder %s36, 1
    %p285 = scmp.ne.s32.totalorder %s280, %s282
    %p286 = scmp.eq.s32.totalorder %s36, 0
    %p287 = por %p285, %p286
    %p288 = scmp.ne.s32.totalorder %s280, %s282
    %p289 = scmp.eq.s32.totalorder %s41, 1
    %p290 = por %p288, %p289
    %p291 = scmp.ne.s32.totalorder %s282, %s283
    %p292 = scmp.eq.s32.totalorder %s41, 0
    %p293 = por %p291, %p292
    %p294 = scmp.ne.s32.totalorder %s282, %s283
    %p295 = scmp.eq.s32.totalorder %s42, 1
    %p296 = por %p294, %p295
    %p298 = scmp.ne.s32.totalorder %s283, %s297
    %p299 = scmp.eq.s32.totalorder %s42, 0
    %p300 = por %p298, %p299
    %s302 = sadd.s32 %s301, 1
    %p305 = scmp.eq.s32.totalorder %s36, 1
    %p306 = scmp.ne.s32.totalorder %s301, %s303
    %p307 = scmp.eq.s32.totalorder %s36, 0
    %p308 = por %p306, %p307
    %p309 = scmp.ne.s32.totalorder %s301, %s303
    %p310 = scmp.eq.s32.totalorder %s41, 1
    %p311 = por %p309, %p310
    %p312 = scmp.ne.s32.totalorder %s303, %s304
    %p313 = scmp.eq.s32.totalorder %s41, 0
    %p314 = por %p312, %p313
    %p315 = scmp.ne.s32.totalorder %s303, %s304
    %p316 = scmp.eq.s32.totalorder %s42, 1
    %p317 = por %p315, %p316
    %p319 = scmp.ne.s32.totalorder %s304, %s318
    %p320 = scmp.eq.s32.totalorder %s42, 0
    %p321 = por %p319, %p320
    %s323 = sadd.s32 %s322, 1
    %p326 = scmp.eq.s32.totalorder %s36, 1
    %p327 = scmp.ne.s32.totalorder %s322, %s324
    %p328 = scmp.eq.s32.totalorder %s36, 0
    %p329 = por %p327, %p328
    %p330 = scmp.ne.s32.totalorder %s322, %s324
    %p331 = scmp.eq.s32.totalorder %s41, 1
    %p332 = por %p330, %p331
    %p333 = scmp.ne.s32.totalorder %s324, %s325
    %p334 = scmp.eq.s32.totalorder %s41, 0
    %p335 = por %p333, %p334
    %p336 = scmp.ne.s32.totalorder %s324, %s325
    %p337 = scmp.eq.s32.totalorder %s42, 1
    %p338 = por %p336, %p337
    %p340 = scmp.ne.s32.totalorder %s325, %s339
    %p341 = scmp.eq.s32.totalorder %s42, 0
    %p342 = por %p340, %p341
    %s344 = sadd.s32 %s343, 1
    %p347 = scmp.eq.s32.totalorder %s36, 1
    %p348 = scmp.ne.s32.totalorder %s343, %s345
    %p349 = scmp.eq.s32.totalorder %s36, 0
    %p350 = por %p348, %p349
    %p351 = scmp.ne.s32.totalorder %s343, %s345
    %p352 = scmp.eq.s32.totalorder %s41, 1
    %p353 = por %p351, %p352
    %p354 = scmp.ne.s32.totalorder %s345, %s346
    %p355 = scmp.eq.s32.totalorder %s41, 0
    %p356 = por %p354, %p355
    %p357 = scmp.ne.s32.totalorder %s345, %s346
    %p358 = scmp.eq.s32.totalorder %s42, 1
    %p359 = por %p357, %p358
    %p361 = scmp.ne.s32.totalorder %s346, %s360
    %p362 = scmp.eq.s32.totalorder %s42, 0
    %p363 = por %p361, %p362
    %s365 = sadd.s32 %s364, 1
    %p368 = scmp.eq.s32.totalorder %s36, 1
    %p369 = scmp.ne.s32.totalorder %s364, %s366
    %p370 = scmp.eq.s32.totalorder %s36, 0
    %p371 = por %p369, %p370
    %p372 = scmp.ne.s32.totalorder %s364, %s366
    %p373 = scmp.eq.s32.totalorder %s41, 1
    %p374 = por %p372, %p373
    %p375 = scmp.ne.s32.totalorder %s366, %s367
    %p376 = scmp.eq.s32.totalorder %s41, 0
    %p377 = por %p375, %p376
    %p378 = scmp.ne.s32.totalorder %s366, %s367
    %p379 = scmp.eq.s32.totalorder %s42, 1
    %p380 = por %p378, %p379
    %p382 = scmp.ne.s32.totalorder %s367, %s381
    %p383 = scmp.eq.s32.totalorder %s42, 0
    %p384 = por %p382, %p383
    %s386 = sadd.s32 %s385, 1
    %p389 = scmp.eq.s32.totalorder %s36, 1
    %p390 = scmp.ne.s32.totalorder %s385, %s387
    %p391 = scmp.eq.s32.totalorder %s36, 0
    %p392 = por %p390, %p391
    %p393 = scmp.ne.s32.totalorder %s385, %s387
    %p394 = scmp.eq.s32.totalorder %s41, 1
    %p395 = por %p393, %p394
    %p396 = scmp.ne.s32.totalorder %s387, %s388
    %p397 = scmp.eq.s32.totalorder %s41, 0
    %p398 = por %p396, %p397
    %p399 = scmp.ne.s32.totalorder %s387, %s388
    %p400 = scmp.eq.s32.totalorder %s42, 1
    %p401 = por %p399, %p400
    %p403 = scmp.ne.s32.totalorder %s388, %s402
    %p404 = scmp.eq.s32.totalorder %s42, 0
    %p405 = por %p403, %p404
    %s407 = sadd.s32 %s406, 1
    %p410 = scmp.eq.s32.totalorder %s36, 1
    %p411 = scmp.ne.s32.totalorder %s406, %s408
    %p412 = scmp.eq.s32.totalorder %s36, 0
    %p413 = por %p411, %p412
    %p414 = scmp.ne.s32.totalorder %s406, %s408
    %p415 = scmp.eq.s32.totalorder %s41, 1
    %p416 = por %p414, %p415
    %p417 = scmp.ne.s32.totalorder %s408, %s409
    %p418 = scmp.eq.s32.totalorder %s41, 0
    %p419 = por %p417, %p418
    %p420 = scmp.ne.s32.totalorder %s408, %s409
    %p421 = scmp.eq.s32.totalorder %s42, 1
    %p422 = por %p420, %p421
    %p424 = scmp.ne.s32.totalorder %s409, %s423
    %p425 = scmp.eq.s32.totalorder %s42, 0
    %p426 = por %p424, %p425
    %s428 = sadd.s32 %s427, 1
    %p431 = scmp.eq.s32.totalorder %s36, 1
    %p432 = scmp.ne.s32.totalorder %s427, %s429
    %p433 = scmp.eq.s32.totalorder %s36, 0
    %p434 = por %p432, %p433
    %p435 = scmp.ne.s32.totalorder %s427, %s429
    %p436 = scmp.eq.s32.totalorder %s41, 1
    %p437 = por %p435, %p436
    %p438 = scmp.ne.s32.totalorder %s429, %s430
    %p439 = scmp.eq.s32.totalorder %s41, 0
    %p440 = por %p438, %p439
    %p441 = scmp.ne.s32.totalorder %s429, %s430
    %p442 = scmp.eq.s32.totalorder %s42, 1
    %p443 = por %p441, %p442
    %p445 = scmp.ne.s32.totalorder %s430, %s444
    %p446 = scmp.eq.s32.totalorder %s42, 0
    %p447 = por %p445, %p446
    %s449 = sadd.s32 %s448, 1
    %p452 = scmp.eq.s32.totalorder %s36, 1
    %p453 = scmp.ne.s32.totalorder %s448, %s450
    %p454 = scmp.eq.s32.totalorder %s36, 0
    %p455 = por %p453, %p454
    %p456 = scmp.ne.s32.totalorder %s448, %s450
    %p457 = scmp.eq.s32.totalorder %s41, 1
    %p458 = por %p456, %p457
    %p459 = scmp.ne.s32.totalorder %s450, %s451
    %p460 = scmp.eq.s32.totalorder %s41, 0
    %p461 = por %p459, %p460
    %p462 = scmp.ne.s32.totalorder %s450, %s451
    %p463 = scmp.eq.s32.totalorder %s42, 1
    %p464 = por %p462, %p463
    %p466 = scmp.ne.s32.totalorder %s451, %s465
    %p467 = scmp.eq.s32.totalorder %s42, 0
    %p468 = por %p466, %p467
    %s470 = sadd.s32 %s469, 1
    %p473 = scmp.eq.s32.totalorder %s36, 1
    %p474 = scmp.ne.s32.totalorder %s469, %s471
    %p475 = scmp.eq.s32.totalorder %s36, 0
    %p476 = por %p474, %p475
    %p477 = scmp.ne.s32.totalorder %s469, %s471
    %p478 = scmp.eq.s32.totalorder %s41, 1
    %p479 = por %p477, %p478
    %p480 = scmp.ne.s32.totalorder %s471, %s472
    %p481 = scmp.eq.s32.totalorder %s41, 0
    %p482 = por %p480, %p481
    %p483 = scmp.ne.s32.totalorder %s471, %s472
    %p484 = scmp.eq.s32.totalorder %s42, 1
    %p485 = por %p483, %p484
    %p487 = scmp.ne.s32.totalorder %s472, %s486
    %p488 = scmp.eq.s32.totalorder %s42, 0
    %p489 = por %p487, %p488
    %s490 = ssub.s32 %s36, %s43
    %p491 = scmp.eq.s32.totalorder %s490, 0
    %s493 = sadd.s32 %s492, 1
    %s494 = scalar_select %p491, %s492, %s493
    %p497 = pneg %p491
    %p498 = scmp.eq.s32.totalorder %s36, 1
    %p499 = por %p497, %p498
    %p500 = scmp.ne.s32.totalorder %s492, %s495
    %p501 = scmp.eq.s32.totalorder %s36, 0
    %p502 = por %p500, %p501
    %p503 = scmp.ne.s32.totalorder %s492, %s495
    %p504 = scmp.eq.s32.totalorder %s41, 1
    %p505 = por %p503, %p504
    %p506 = scmp.ne.s32.totalorder %s495, %s496
    %p507 = scmp.eq.s32.totalorder %s41, 0
    %p508 = por %p506, %p507
    %p509 = scmp.ne.s32.totalorder %s495, %s496
    %p510 = scmp.eq.s32.totalorder %s42, 1
    %p511 = por %p509, %p510
    %p513 = scmp.ne.s32.totalorder %s496, %s512
    %p514 = scmp.eq.s32.totalorder %s42, 0
    %p515 = por %p513, %p514
    %p516 = scmp.le.s32.totalorder 1, %s36
    %p517 = scmp.lt.s32.totalorder %s36, 3
    %p518 = pnand %p516, %p517
    %p519 = pneg %p518
    // Predicated region
    $region9: #{tpu_custom_call.1} parent=5 // pred_check
      _
    $region10: #{tpu_custom_call.1} parent=5 // pred_check_branch
      %521 = sbr.rel (%p518) target = $region12
    $region11: #{tpu_custom_call.1} parent=5 // pred_region
      %s522 = ssub.s32 %s36, 1
      // Predicated region
      $region13: #{tpu_custom_call.1} parent=11 // pred_check
        %p523 = pneg %p83
      $region14: #{tpu_custom_call.1} parent=11 // pred_check_branch
        %525 = sbr.rel (%p523) target = $region16
      $region15: #{tpu_custom_call.1} parent=11 // pred_region
        _
      $region16: #{tpu_custom_call.1} parent=11 // pred_fallthru
        _
      // Predicated region
      $region17: #{tpu_custom_call.1} parent=11 // pred_check
        %p526 = pneg %p104
      $region18: #{tpu_custom_call.1} parent=11 // pred_check_branch
        %528 = sbr.rel (%p526) target = $region20
      $region19: #{tpu_custom_call.1} parent=11 // pred_region
        _
      $region20: #{tpu_custom_call.1} parent=11 // pred_fallthru
        _
      // Predicated region
      $region21: #{tpu_custom_call.1} parent=11 // pred_check
        %p529 = pneg %p125
      $region22: #{tpu_custom_call.1} parent=11 // pred_check_branch
        %531 = sbr.rel (%p529) target = $region24
      $region23: #{tpu_custom_call.1} parent=11 // pred_region
        _
      $region24: #{tpu_custom_call.1} parent=11 // pred_fallthru
        _
      // Predicated region
      $region25: #{tpu_custom_call.1} parent=11 // pred_check
        %p532 = pneg %p146
      $region26: #{tpu_custom_call.1} parent=11 // pred_check_branch
        %534 = sbr.rel (%p532) target = $region28
      $region27: #{tpu_custom_call.1} parent=11 // pred_region
        _
      $region28: #{tpu_custom_call.1} parent=11 // pred_fallthru
        _
      // Predicated region
      $region29: #{tpu_custom_call.1} parent=11 // pred_check
        %p535 = pneg %p167
      $region30: #{tpu_custom_call.1} parent=11 // pred_check_branch
        %537 = sbr.rel (%p535) target = $region32
      $region31: #{tpu_custom_call.1} parent=11 // pred_region
        _
      $region32: #{tpu_custom_call.1} parent=11 // pred_fallthru
        _
      // Predicated region
      $region33: #{tpu_custom_call.1} parent=11 // pred_check
        %p538 = pneg %p188
      $region34: #{tpu_custom_call.1} parent=11 // pred_check_branch
        %540 = sbr.rel (%p538) target = $region36
      $region35: #{tpu_custom_call.1} parent=11 // pred_region
        _
      $region36: #{tpu_custom_call.1} parent=11 // pred_fallthru
        _
      // Predicated region
      $region37: #{tpu_custom_call.1} parent=11 // pred_check
        %p541 = pneg %p209
      $region38: #{tpu_custom_call.1} parent=11 // pred_check_branch
        %543 = sbr.rel (%p541) target = $region40
      $region39: #{tpu_custom_call.1} parent=11 // pred_region
        _
      $region40: #{tpu_custom_call.1} parent=11 // pred_fallthru
        _
      // Predicated region
      $region41: #{tpu_custom_call.1} parent=11 // pred_check
        %p544 = pneg %p230
      $region42: #{tpu_custom_call.1} parent=11 // pred_check_branch
        %546 = sbr.rel (%p544) target = $region44
      $region43: #{tpu_custom_call.1} parent=11 // pred_region
        _
      $region44: #{tpu_custom_call.1} parent=11 // pred_fallthru
        _
      // Predicated region
      $region45: #{tpu_custom_call.1} parent=11 // pred_check
        %p547 = pneg %p251
      $region46: #{tpu_custom_call.1} parent=11 // pred_check_branch
        %549 = sbr.rel (%p547) target = $region48
      $region47: #{tpu_custom_call.1} parent=11 // pred_region
        _
      $region48: #{tpu_custom_call.1} parent=11 // pred_fallthru
        _
      // Predicated region
      $region49: #{tpu_custom_call.1} parent=11 // pred_check
        %p550 = pneg %p272
      $region50: #{tpu_custom_call.1} parent=11 // pred_check_branch
        %552 = sbr.rel (%p550) target = $region52
      $region51: #{tpu_custom_call.1} parent=11 // pred_region
        _
      $region52: #{tpu_custom_call.1} parent=11 // pred_fallthru
        _
      // Predicated region
      $region53: #{tpu_custom_call.1} parent=11 // pred_check
        %p553 = pneg %p293
      $region54: #{tpu_custom_call.1} parent=11 // pred_check_branch
        %555 = sbr.rel (%p553) target = $region56
      $region55: #{tpu_custom_call.1} parent=11 // pred_region
        _
      $region56: #{tpu_custom_call.1} parent=11 // pred_fallthru
        _
      // Predicated region
      $region57: #{tpu_custom_call.1} parent=11 // pred_check
        %p556 = pneg %p314
      $region58: #{tpu_custom_call.1} parent=11 // pred_check_branch
        %558 = sbr.rel (%p556) target = $region60
      $region59: #{tpu_custom_call.1} parent=11 // pred_region
        _
      $region60: #{tpu_custom_call.1} parent=11 // pred_fallthru
        _
      // Predicated region
      $region61: #{tpu_custom_call.1} parent=11 // pred_check
        %p559 = pneg %p335
      $region62: #{tpu_custom_call.1} parent=11 // pred_check_branch
        %561 = sbr.rel (%p559) target = $region64
      $region63: #{tpu_custom_call.1} parent=11 // pred_region
        _
      $region64: #{tpu_custom_call.1} parent=11 // pred_fallthru
        _
      // Predicated region
      $region65: #{tpu_custom_call.1} parent=11 // pred_check
        %p562 = pneg %p356
      $region66: #{tpu_custom_call.1} parent=11 // pred_check_branch
        %564 = sbr.rel (%p562) target = $region68
      $region67: #{tpu_custom_call.1} parent=11 // pred_region
        _
      $region68: #{tpu_custom_call.1} parent=11 // pred_fallthru
        _
      // Predicated region
      $region69: #{tpu_custom_call.1} parent=11 // pred_check
        %p565 = pneg %p377
      $region70: #{tpu_custom_call.1} parent=11 // pred_check_branch
        %567 = sbr.rel (%p565) target = $region72
      $region71: #{tpu_custom_call.1} parent=11 // pred_region
        _
      $region72: #{tpu_custom_call.1} parent=11 // pred_fallthru
        _
      // Predicated region
      $region73: #{tpu_custom_call.1} parent=11 // pred_check
        %p568 = pneg %p398
      $region74: #{tpu_custom_call.1} parent=11 // pred_check_branch
        %570 = sbr.rel (%p568) target = $region76
      $region75: #{tpu_custom_call.1} parent=11 // pred_region
        _
      $region76: #{tpu_custom_call.1} parent=11 // pred_fallthru
        _
      // Predicated region
      $region77: #{tpu_custom_call.1} parent=11 // pred_check
        %p571 = pneg %p419
      $region78: #{tpu_custom_call.1} parent=11 // pred_check_branch
        %573 = sbr.rel (%p571) target = $region80
      $region79: #{tpu_custom_call.1} parent=11 // pred_region
        _
      $region80: #{tpu_custom_call.1} parent=11 // pred_fallthru
        _
      // Predicated region
      $region81: #{tpu_custom_call.1} parent=11 // pred_check
        %p574 = pneg %p440
      $region82: #{tpu_custom_call.1} parent=11 // pred_check_branch
        %576 = sbr.rel (%p574) target = $region84
      $region83: #{tpu_custom_call.1} parent=11 // pred_region
        _
      $region84: #{tpu_custom_call.1} parent=11 // pred_fallthru
        _
      // Predicated region
      $region85: #{tpu_custom_call.1} parent=11 // pred_check
        %p577 = pneg %p461
      $region86: #{tpu_custom_call.1} parent=11 // pred_check_branch
        %579 = sbr.rel (%p577) target = $region88
      $region87: #{tpu_custom_call.1} parent=11 // pred_region
        _
      $region88: #{tpu_custom_call.1} parent=11 // pred_fallthru
        _
      // Predicated region
      $region89: #{tpu_custom_call.1} parent=11 // pred_check
        %p580 = pneg %p482
      $region90: #{tpu_custom_call.1} parent=11 // pred_check_branch
        %582 = sbr.rel (%p580) target = $region92
      $region91: #{tpu_custom_call.1} parent=11 // pred_region
        _
      $region92: #{tpu_custom_call.1} parent=11 // pred_fallthru
        _
    $region12: #{tpu_custom_call.1} parent=5 // pred_fallthru
      _
    %p583 = scmp.lt.s32.totalorder %s36, 2
    // Predicated region
    $region93: #{tpu_custom_call.1} parent=5 // pred_check
      %p584 = pneg %p583
    $region94: #{tpu_custom_call.1} parent=5 // pred_check_branch
      %586 = sbr.rel (%p584) target = $region96
    $region95: #{tpu_custom_call.1} parent=5 // pred_region
      // Predicated region
      $region97: #{tpu_custom_call.1} parent=95 // pred_check
        %p587 = pneg %p56
      $region98: #{tpu_custom_call.1} parent=95 // pred_check_branch
        %589 = sbr.rel (%p587) target = $region100
      $region99: #{tpu_custom_call.1} parent=95 // pred_region
        %p590 = scmp.lt.s32.totalorder %s36, 1
        %s591 = scalar_select %p590, %s36, 1
        %s592 = smul.addr %s591, 4
        %s593 = scalar_lea.vmem %s1, %s592
      $region100: #{tpu_custom_call.1} parent=95 // pred_fallthru
        _
    $region96: #{tpu_custom_call.1} parent=5 // pred_fallthru
      _
    %p594 = scmp.le.s32.totalorder 1, %s36
    %p595 = scmp.lt.s32.totalorder %s36, 3
    %p596 = pnand %p594, %p595
    %p597 = pneg %p596
    // Predicated region
    $region101: #{tpu_custom_call.1} parent=5 // pred_check
      _
    $region102: #{tpu_custom_call.1} parent=5 // pred_check_branch
      %599 = sbr.rel (%p596) target = $region104
    $region103: #{tpu_custom_call.1} parent=5 // pred_region
      %s600 = ssub.s32 %s36, 1
      %p601 = scmp.lt.s32.totalorder %s41, 1
      %s602 = scalar_select %p601, %s41, 1
      %s603 = smul.addr %s602, 4
      %s604 = scalar_lea.vmem %s1, %s603
      %p605 = pneg %p62
      %p606 = pneg %p59
      %p607 = pneg %p83
      %p608 = pneg %p80
      %p609 = pneg %p104
      %p610 = pneg %p101
      %p611 = pneg %p125
      %p612 = pneg %p122
      %p613 = pneg %p146
      %p614 = pneg %p143
      %p615 = pneg %p167
      %p616 = pneg %p164
      %p617 = pneg %p188
      %p618 = pneg %p185
      %p619 = pneg %p209
      %p620 = pneg %p206
      %p621 = pneg %p230
      %p622 = pneg %p227
      %p623 = pneg %p251
      %p624 = pneg %p248
      %p625 = pneg %p272
      %p626 = pneg %p269
      %p627 = pneg %p293
      %p628 = pneg %p290
      %p629 = pneg %p314
      %p630 = pneg %p311
      %p631 = pneg %p335
      %p632 = pneg %p332
      %p633 = pneg %p356
      %p634 = pneg %p353
      %p635 = pneg %p377
      %p636 = pneg %p374
      %p637 = pneg %p398
      %p638 = pneg %p395
      %p639 = pneg %p419
      %p640 = pneg %p416
      %p641 = pneg %p440
      %p642 = pneg %p437
      %p643 = pneg %p461
      %p644 = pneg %p458
      %p645 = pneg %p482
      %p646 = pneg %p479
      %p647 = pneg %p508
      %p648 = pneg %p505
      %p649 = scmp.lt.s32.totalorder %s41, 1
      %s650 = scalar_select %p649, %s41, 1
      %s651 = smul.addr %s650, 4
      %s652 = scalar_lea.vmem %s22, %s651
      %p653 = scmp.lt.s32.totalorder %s41, 1
      %s654 = scalar_select %p653, %s41, 1
      %s655 = smul.addr %s654, 4
      %s656 = scalar_lea.vmem %s1, %s655
      %p657 = scmp.lt.s32.totalorder %s41, 1
      %s658 = scalar_select %p657, %s41, 1
      %s659 = smul.addr %s658, 4
      %s660 = scalar_lea.vmem %s22, %s659
      %v662 = vlaneseq
      %v663 = vand.u32 %v662, 127
      %s664 = sld [smem:[#allocation3 + %s41]]
      %v665 = vstv %s664
      %vm666 = vcmp.lt.s32.totalorder %v663, %v665
      %v667 = vsel %vm666, 0.0, -1e+09
      %v668 = vld [vmem:[%s656] sm:$0x7]
      %v669 = vunpack.c.l.bf16 %v668
      %vm670 = vcmp.lt.s32.totalorder %v663, 32
      %v671 = vsel %vm670, 1, 0
      %v672 = vcvt.s32.f32 %v671
      %vm673 = vcmask 1045504
      %v674 = vsel %vm673, %v669, 0.0
      %675 = vadd.xlane.f32.xlu0 %v674
      %v676 = vpop.xlane.xlu0 %675
      %v677 = vmul.f32 %v676, 0.03125
      %v678 = vsub.f32 %v669, %v677
      %v679 = vmul.f32 %v678, %v672
      %v680 = vmul.f32 %v679, %v679
      %v681 = vsel %vm673, %v680, 0.0
      %682 = vadd.xlane.f32.xlu0 %v681
      %v683 = vpop.xlane.xlu0 %682
      %v684 = vmul.f32 %v683, 0.03125
      %v685 = vadd.f32 %v684, 1e-05
      %v686 = vrsqrt.pop %v685
      %v687 = vmul.f32 %v686, %v685
      %v688 = vmul.f32 %v687, %v686
      %v689 = vmul.f32 0.5, %v688
      %v690 = vsub.f32 1.5, %v689
      %v691 = vmul.f32 %v686, %v690
      %vm692 = vweird.f32 %v685
      %vm693 = vweird.f32 %v686
      %vm694 = vmor %vm692, %vm693
      %v695 = vsel %vm694, %v686, %v691
      %v696 = vmul.f32 %v679, %v695
      %v697 = vld [vmem:[%s2] sm:$0x1]
      %v699 = vperm.slane %v697, 0
      %v701 = vmul.f32 %v696, %v699
      %v702 = vld [vmem:[%s3] sm:$0x1]
      %v704 = vperm.slane %v702, 0
      %v706 = vadd.f32 %v701, %v704
      %v707 = vpack.c.bf16 %v706, %v706
      %v708 = vld [vmem:[%s4] sm:$0xf]
      %v709 = vld [vmem:[%s4 + $0x4] sm:$0xf]
      %v710 = vld [vmem:[%s4 + $0x8] sm:$0xf]
      %v711 = vld [vmem:[%s4 + $0xc] sm:$0xf]
      %v712 = vld [vmem:[%s4 + $0x10] sm:$0xf]
      %v713 = vld [vmem:[%s4 + $0x14] sm:$0xf]
      %v714 = vld [vmem:[%s4 + $0x18] sm:$0xf]
      %v715 = vld [vmem:[%s4 + $0x1c] sm:$0xf]
      %v716 = vld [vmem:[%s4 + $0x20] sm:$0xf]
      %v717 = vld [vmem:[%s4 + $0x24] sm:$0xf]
      %v718 = vld [vmem:[%s4 + $0x28] sm:$0xf]
      %v719 = vld [vmem:[%s4 + $0x2c] sm:$0xf]
      %v720 = vld [vmem:[%s4 + $0x30] sm:$0xf]
      %v721 = vld [vmem:[%s4 + $0x34] sm:$0xf]
      %v722 = vld [vmem:[%s4 + $0x38] sm:$0xf]
      %v723 = vld [vmem:[%s4 + $0x3c] sm:$0xf]
      %v724 = vld [vmem:[%s7] sm:$0x1]
      %v726 = vperm.slane %v724, 0
      %v744 = vunpack.c.l.b16 %v708
      %v745 = vunpack.c.l.b16 %v709
      %v746 = vunpack.c.l.b16 %v710
      %v747 = vunpack.c.l.b16 %v711
      %v748 = vunpack.c.l.b16 %v712
      %v749 = vunpack.c.l.b16 %v713
      %v750 = vunpack.c.l.b16 %v714
      %v751 = vunpack.c.l.b16 %v715
      %v752 = vunpack.c.l.b16 %v716
      %v753 = vunpack.c.l.b16 %v717
      %v754 = vunpack.c.l.b16 %v718
      %v755 = vunpack.c.l.b16 %v719
      %v756 = vunpack.c.l.b16 %v720
      %v757 = vunpack.c.l.b16 %v721
      %v758 = vunpack.c.l.b16 %v722
      %v759 = vunpack.c.l.b16 %v723
      %v760 = vpack.c.b16 %v745, %v744
      %v761 = vpack.c.b16 %v747, %v746
      %v762 = vpack.c.b16 %v749, %v748
      %v763 = vpack.c.b16 %v751, %v750
      %v764 = vpack.c.b16 %v753, %v752
      %v765 = vpack.c.b16 %v755, %v754
      %v766 = vpack.c.b16 %v757, %v756
      %v767 = vpack.c.b16 %v759, %v758
      %776 = vmatpush.bf16.msra.mxu0 %v767
      %777 = vmatpush.bf16.msra.mxu0 %v766
      %778 = vmatpush.bf16.msra.mxu0 %v765
      %779 = vmatpush.bf16.msra.mxu0 %v764
      %780 = vmatpush.bf16.msra.mxu0 %v763
      %781 = vmatpush.bf16.msra.mxu0 %v762
      %782 = vmatpush.bf16.msra.mxu0 %v761
      %783 = vmatpush.bf16.msra.mxu0 %v760
      %784 = vmatmul.bf16.gmra.mxu0 %v707
      %v785 = vpop.f32.mrf.mxu0
      %v786 = vadd.f32 %v726, %v785
      %v787 = vpop.f32.mrf.mxu0
      %788 = vdwg.mxu0
      %v789 = vld [vmem:[%s5] sm:$0xf]
      %v790 = vld [vmem:[%s5 + $0x4] sm:$0xf]
      %v791 = vld [vmem:[%s5 + $0x8] sm:$0xf]
      %v792 = vld [vmem:[%s5 + $0xc] sm:$0xf]
      %v793 = vld [vmem:[%s5 + $0x10] sm:$0xf]
      %v794 = vld [vmem:[%s5 + $0x14] sm:$0xf]
      %v795 = vld [vmem:[%s5 + $0x18] sm:$0xf]
      %v796 = vld [vmem:[%s5 + $0x1c] sm:$0xf]
      %v797 = vld [vmem:[%s5 + $0x20] sm:$0xf]
      %v798 = vld [vmem:[%s5 + $0x24] sm:$0xf]
      %v799 = vld [vmem:[%s5 + $0x28] sm:$0xf]
      %v800 = vld [vmem:[%s5 + $0x2c] sm:$0xf]
      %v801 = vld [vmem:[%s5 + $0x30] sm:$0xf]
      %v802 = vld [vmem:[%s5 + $0x34] sm:$0xf]
      %v803 = vld [vmem:[%s5 + $0x38] sm:$0xf]
      %v804 = vld [vmem:[%s5 + $0x3c] sm:$0xf]
      %v805 = vld [vmem:[%s8] sm:$0x1]
      %v807 = vperm.slane %v805, 0
      %v825 = vunpack.c.l.b16 %v789
      %v826 = vunpack.c.l.b16 %v790
      %v827 = vunpack.c.l.b16 %v791
      %v828 = vunpack.c.l.b16 %v792
      %v829 = vunpack.c.l.b16 %v793
      %v830 = vunpack.c.l.b16 %v794
      %v831 = vunpack.c.l.b16 %v795
      %v832 = vunpack.c.l.b16 %v796
      %v833 = vunpack.c.l.b16 %v797
      %v834 = vunpack.c.l.b16 %v798
      %v835 = vunpack.c.l.b16 %v799
      %v836 = vunpack.c.l.b16 %v800
      %v837 = vunpack.c.l.b16 %v801
      %v838 = vunpack.c.l.b16 %v802
      %v839 = vunpack.c.l.b16 %v803
      %v840 = vunpack.c.l.b16 %v804
      %v841 = vpack.c.b16 %v826, %v825
      %v842 = vpack.c.b16 %v828, %v827
      %v843 = vpack.c.b16 %v830, %v829
      %v844 = vpack.c.b16 %v832, %v831
      %v845 = vpack.c.b16 %v834, %v833
      %v846 = vpack.c.b16 %v836, %v835
      %v847 = vpack.c.b16 %v838, %v837
      %v848 = vpack.c.b16 %v840, %v839
      %857 = vmatpush.bf16.msra.mxu0 %v848
      %858 = vmatpush.bf16.msra.mxu0 %v847
      %859 = vmatpush.bf16.msra.mxu0 %v846
      %860 = vmatpush.bf16.msra.mxu0 %v845
      %861 = vmatpush.bf16.msra.mxu0 %v844
      %862 = vmatpush.bf16.msra.mxu0 %v843
      %863 = vmatpush.bf16.msra.mxu0 %v842
      %864 = vmatpush.bf16.msra.mxu0 %v841
      %865 = vmatmul.bf16.gmra.mxu0 %v707
      %v866 = vpop.f32.mrf.mxu0
      %v867 = vadd.f32 %v807, %v866
      %v868 = vpop.f32.mrf.mxu0
      %869 = vdwg.mxu0
      %v870 = vld [vmem:[%s6] sm:$0xf]
      %v871 = vld [vmem:[%s6 + $0x4] sm:$0xf]
      %v872 = vld [vmem:[%s6 + $0x8] sm:$0xf]
      %v873 = vld [vmem:[%s6 + $0xc] sm:$0xf]
      %v874 = vld [vmem:[%s6 + $0x10] sm:$0xf]
      %v875 = vld [vmem:[%s6 + $0x14] sm:$0xf]
      %v876 = vld [vmem:[%s6 + $0x18] sm:$0xf]
      %v877 = vld [vmem:[%s6 + $0x1c] sm:$0xf]
      %v878 = vld [vmem:[%s6 + $0x20] sm:$0xf]
      %v879 = vld [vmem:[%s6 + $0x24] sm:$0xf]
      %v880 = vld [vmem:[%s6 + $0x28] sm:$0xf]
      %v881 = vld [vmem:[%s6 + $0x2c] sm:$0xf]
      %v882 = vld [vmem:[%s6 + $0x30] sm:$0xf]
      %v883 = vld [vmem:[%s6 + $0x34] sm:$0xf]
      %v884 = vld [vmem:[%s6 + $0x38] sm:$0xf]
      %v885 = vld [vmem:[%s6 + $0x3c] sm:$0xf]
      %v886 = vld [vmem:[%s9] sm:$0x1]
      %v888 = vperm.slane %v886, 0
      %v906 = vunpack.c.l.b16 %v870
      %v907 = vunpack.c.l.b16 %v871
      %v908 = vunpack.c.l.b16 %v872
      %v909 = vunpack.c.l.b16 %v873
      %v910 = vunpack.c.l.b16 %v874
      %v911 = vunpack.c.l.b16 %v875
      %v912 = vunpack.c.l.b16 %v876
      %v913 = vunpack.c.l.b16 %v877
      %v914 = vunpack.c.l.b16 %v878
      %v915 = vunpack.c.l.b16 %v879
      %v916 = vunpack.c.l.b16 %v880
      %v917 = vunpack.c.l.b16 %v881
      %v918 = vunpack.c.l.b16 %v882
      %v919 = vunpack.c.l.b16 %v883
      %v920 = vunpack.c.l.b16 %v884
      %v921 = vunpack.c.l.b16 %v885
      %v922 = vpack.c.b16 %v907, %v906
      %v923 = vpack.c.b16 %v909, %v908
      %v924 = vpack.c.b16 %v911, %v910
      %v925 = vpack.c.b16 %v913, %v912
      %v926 = vpack.c.b16 %v915, %v914
      %v927 = vpack.c.b16 %v917, %v916
      %v928 = vpack.c.b16 %v919, %v918
      %v929 = vpack.c.b16 %v921, %v920
      %938 = vmatpush.bf16.msra.mxu0 %v929
      %939 = vmatpush.bf16.msra.mxu0 %v928
      %940 = vmatpush.bf16.msra.mxu0 %v927
      %941 = vmatpush.bf16.msra.mxu0 %v926
      %942 = vmatpush.bf16.msra.mxu0 %v925
      %943 = vmatpush.bf16.msra.mxu0 %v924
      %944 = vmatpush.bf16.msra.mxu0 %v923
      %945 = vmatpush.bf16.msra.mxu0 %v922
      %946 = vmatmul.bf16.gmra.mxu0 %v707
      %v947 = vpop.f32.mrf.mxu0
      %v948 = vadd.f32 %v888, %v947
      %v949 = vpop.f32.mrf.mxu0
      %950 = vdwg.mxu0
      %v951 = vpack.c.bf16 %v786, %v786
      %v952 = vpack.c.bf16 %v867, %v867
      %vm953 = vcmask 64512
      %v955 = vsel %vm953, %v951, 0
      %v958 = vsel %vm953, %v952, 0
      %960 = vmatpush.bf16.xpose.msra.mxu0 0
      %961 = vmatpush.bf16.xpose.msra.mxu0 0
      %962 = vmatpush.bf16.xpose.msra.mxu0 0
      %963 = vmatpush.bf16.xpose.msra.mxu0 0
      %964 = vmatpush.bf16.xpose.msra.mxu0 0
      %965 = vmatpush.bf16.xpose.msra.mxu0 0
      %966 = vmatpush.bf16.xpose.msra.mxu0 0
      %967 = vmatpush.bf16.xpose.msra.mxu0 %v958
      %968 = vmatmul.bf16.gmra.mxu0 %v955
      %v969 = vpop.f32.mrf.mxu0
      %v970 = vadd.f32 %v667, %v969
      %v971 = vpop.f32.mrf.mxu0
      %972 = vdwg.mxu0
      %vm973 = vcmask 46080
      %v974 = vsel %vm973, %v970, -inf
      %975 = vmax.xlane.f32.xlu0 %v974
      %v976 = vpop.xlane.xlu0 %975
      %v977 = vsub.f32 %v970, %v976
      %v978 = vmul.f32 %v977, 1.442695
      %v979 = vpow.pop %v978
      %v980 = vsel %vm973, %v979, 0.0
      %981 = vadd.xlane.f32.xlu0 %v980
      %v982 = vpop.xlane.xlu0 %981
      %v983 = vrcp.pop %v982
      %v984 = vmul.f32 %v979, %v983
      %v985 = vpack.c.bf16 %v984, %v984
      %v986 = vpack.c.bf16 %v948, %v948
      %vm987 = vcmask 48128
      %v989 = vsel %vm987, %v985, 0
      %vm991 = vcmask 1042432
      %v993 = vsel %vm991, %v986, 0
      %995 = vmatpush.bf16.msra.mxu0 0
      %996 = vmatpush.bf16.msra.mxu0 0
      %997 = vmatpush.bf16.msra.mxu0 0
      %998 = vmatpush.bf16.msra.mxu0 0
      %999 = vmatpush.bf16.msra.mxu0 0
      %1000 = vmatpush.bf16.msra.mxu0 0
      %1001 = vmatpush.bf16.msra.mxu0 0
      %1002 = vmatpush.bf16.msra.mxu0 %v993
      %1003 = vmatmul.bf16.gmra.mxu0 %v989
      %v1004 = vpop.f32.mrf.mxu0
      %v1005 = vadd.f32 0.0, %v1004
      %v1006 = vpop.f32.mrf.mxu0
      %1007 = vdwg.mxu0
      %1009 = vrot.lane.b32.xlu0 %v951, 120
      %v1010 = vpop.permute.xlu0 %1009
      %1012 = vrot.lane.b32.xlu0 %v952, 120
      %v1013 = vpop.permute.xlu0 %1012
      %v1015 = vsel %vm953, %v1010, 0
      %v1018 = vsel %vm953, %v1013, 0
      %1020 = vmatpush.bf16.xpose.msra.mxu0 0
      %1021 = vmatpush.bf16.xpose.msra.mxu0 0
      %1022 = vmatpush.bf16.xpose.msra.mxu0 0
      %1023 = vmatpush.bf16.xpose.msra.mxu0 0
      %1024 = vmatpush.bf16.xpose.msra.mxu0 0
      %1025 = vmatpush.bf16.xpose.msra.mxu0 0
      %1026 = vmatpush.bf16.xpose.msra.mxu0 0
      %1027 = vmatpush.bf16.xpose.msra.mxu0 %v1018
      %1028 = vmatmul.bf16.gmra.mxu0 %v1015
      %v1029 = vpop.f32.mrf.mxu0
      %v1030 = vadd.f32 %v667, %v1029
      %v1031 = vpop.f32.mrf.mxu0
      %1032 = vdwg.mxu0
      %v1033 = vsel %vm973, %v1030, -inf
      %1034 = vmax.xlane.f32.xlu0 %v1033
      %v1035 = vpop.xlane.xlu0 %1034
      %v1036 = vsub.f32 %v1030, %v1035
      %v1037 = vmul.f32 %v1036, 1.442695
      %v1038 = vpow.pop %v1037
      %v1039 = vsel %vm973, %v1038, 0.0
      %1040 = vadd.xlane.f32.xlu0 %v1039
      %v1041 = vpop.xlane.xlu0 %1040
      %v1042 = vrcp.pop %v1041
      %v1043 = vmul.f32 %v1038, %v1042
      %v1044 = vpack.c.bf16 %v1043, %v1043
      %1046 = vrot.lane.b32.xlu0 %v986, 120
      %v1047 = vpop.permute.xlu0 %1046
      %v1049 = vsel %vm987, %v1044, 0
      %v1052 = vsel %vm991, %v1047, 0
      %1054 = vmatpush.bf16.msra.mxu0 0
      %1055 = vmatpush.bf16.msra.mxu0 0
      %1056 = vmatpush.bf16.msra.mxu0 0
      %1057 = vmatpush.bf16.msra.mxu0 0
      %1058 = vmatpush.bf16.msra.mxu0 0
      %1059 = vmatpush.bf16.msra.mxu0 0
      %1060 = vmatpush.bf16.msra.mxu0 0
      %1061 = vmatpush.bf16.msra.mxu0 %v1052
      %1062 = vmatmul.bf16.gmra.mxu0 %v1049
      %v1063 = vpop.f32.mrf.mxu0
      %v1064 = vadd.f32 0.0, %v1063
      %v1065 = vpop.f32.mrf.mxu0
      %1066 = vdwg.mxu0
      %1067 = vrot.lane.b32.xlu0 %v951, 112
      %v1068 = vpop.permute.xlu0 %1067
      %1069 = vrot.lane.b32.xlu0 %v952, 112
      %v1070 = vpop.permute.xlu0 %1069
      %v1072 = vsel %vm953, %v1068, 0
      %v1075 = vsel %vm953, %v1070, 0
      %1077 = vmatpush.bf16.xpose.msra.mxu0 0
      %1078 = vmatpush.bf16.xpose.msra.mxu0 0
      %1079 = vmatpush.bf16.xpose.msra.mxu0 0
      %1080 = vmatpush.bf16.xpose.msra.mxu0 0
      %1081 = vmatpush.bf16.xpose.msra.mxu0 0
      %1082 = vmatpush.bf16.xpose.msra.mxu0 0
      %1083 = vmatpush.bf16.xpose.msra.mxu0 0
      %1084 = vmatpush.bf16.xpose.msra.mxu0 %v1075
      %1085 = vmatmul.bf16.gmra.mxu0 %v1072
      %v1086 = vpop.f32.mrf.mxu0
      %v1087 = vadd.f32 %v667, %v1086
      %v1088 = vpop.f32.mrf.mxu0
      %1089 = vdwg.mxu0
      %v1090 = vsel %vm973, %v1087, -inf
      %1091 = vmax.xlane.f32.xlu0 %v1090
      %v1092 = vpop.xlane.xlu0 %1091
      %v1093 = vsub.f32 %v1087, %v1092
      %v1094 = vmul.f32 %v1093, 1.442695
      %v1095 = vpow.pop %v1094
      %v1096 = vsel %vm973, %v1095, 0.0
      %1097 = vadd.xlane.f32.xlu0 %v1096
      %v1098 = vpop.xlane.xlu0 %1097
      %v1099 = vrcp.pop %v1098
      %v1100 = vmul.f32 %v1095, %v1099
      %v1101 = vpack.c.bf16 %v1100, %v1100
      %1102 = vrot.lane.b32.xlu0 %v986, 112
      %v1103 = vpop.permute.xlu0 %1102
      %v1105 = vsel %vm987, %v1101, 0
      %v1108 = vsel %vm991, %v1103, 0
      %1110 = vmatpush.bf16.msra.mxu0 0
      %1111 = vmatpush.bf16.msra.mxu0 0
      %1112 = vmatpush.bf16.msra.mxu0 0
      %1113 = vmatpush.bf16.msra.mxu0 0
      %1114 = vmatpush.bf16.msra.mxu0 0
      %1115 = vmatpush.bf16.msra.mxu0 0
      %1116 = vmatpush.bf16.msra.mxu0 0
      %1117 = vmatpush.bf16.msra.mxu0 %v1108
      %1118 = vmatmul.bf16.gmra.mxu0 %v1105
      %v1119 = vpop.f32.mrf.mxu0
      %v1120 = vadd.f32 0.0, %v1119
      %v1121 = vpop.f32.mrf.mxu0
      %1122 = vdwg.mxu0
      %1123 = vrot.lane.b32.xlu0 %v951, 104
      %v1124 = vpop.permute.xlu0 %1123
      %1125 = vrot.lane.b32.xlu0 %v952, 104
      %v1126 = vpop.permute.xlu0 %1125
      %v1128 = vsel %vm953, %v1124, 0
      %v1131 = vsel %vm953, %v1126, 0
      %1133 = vmatpush.bf16.xpose.msra.mxu0 0
      %1134 = vmatpush.bf16.xpose.msra.mxu0 0
      %1135 = vmatpush.bf16.xpose.msra.mxu0 0
      %1136 = vmatpush.bf16.xpose.msra.mxu0 0
      %1137 = vmatpush.bf16.xpose.msra.mxu0 0
      %1138 = vmatpush.bf16.xpose.msra.mxu0 0
      %1139 = vmatpush.bf16.xpose.msra.mxu0 0
      %1140 = vmatpush.bf16.xpose.msra.mxu0 %v1131
      %1141 = vmatmul.bf16.gmra.mxu0 %v1128
      %v1142 = vpop.f32.mrf.mxu0
      %v1143 = vadd.f32 %v667, %v1142
      %v1144 = vpop.f32.mrf.mxu0
      %1145 = vdwg.mxu0
      %v1146 = vsel %vm973, %v1143, -inf
      %1147 = vmax.xlane.f32.xlu0 %v1146
      %v1148 = vpop.xlane.xlu0 %1147
      %v1149 = vsub.f32 %v1143, %v1148
      %v1150 = vmul.f32 %v1149, 1.442695
      %v1151 = vpow.pop %v1150
      %v1152 = vsel %vm973, %v1151, 0.0
      %1153 = vadd.xlane.f32.xlu0 %v1152
      %v1154 = vpop.xlane.xlu0 %1153
      %v1155 = vrcp.pop %v1154
      %v1156 = vmul.f32 %v1151, %v1155
      %v1157 = vpack.c.bf16 %v1156, %v1156
      %1158 = vrot.lane.b32.xlu0 %v986, 104
      %v1159 = vpop.permute.xlu0 %1158
      %v1161 = vsel %vm987, %v1157, 0
      %v1164 = vsel %vm991, %v1159, 0
      %1166 = vmatpush.bf16.msra.mxu0 0
      %1167 = vmatpush.bf16.msra.mxu0 0
      %1168 = vmatpush.bf16.msra.mxu0 0
      %1169 = vmatpush.bf16.msra.mxu0 0
      %1170 = vmatpush.bf16.msra.mxu0 0
      %1171 = vmatpush.bf16.msra.mxu0 0
      %1172 = vmatpush.bf16.msra.mxu0 0
      %1173 = vmatpush.bf16.msra.mxu0 %v1164
      %1174 = vmatmul.bf16.gmra.mxu0 %v1161
      %v1175 = vpop.f32.mrf.mxu0
      %v1176 = vadd.f32 0.0, %v1175
      %v1177 = vpop.f32.mrf.mxu0
      %1178 = vdwg.mxu0
      %1180 = vrot.lane.b32.xlu0 %v1064, 8
      %v1181 = vpop.permute.xlu0 %1180
      %1184 = vrot.lane.b32.xlu0 %v1120, 16
      %v1185 = vpop.permute.xlu0 %1184
      %1188 = vrot.lane.b32.xlu0 %v1176, 24
      %v1189 = vpop.permute.xlu0 %1188
      %v1191 = vsel %vm953, %v1005, %v1181
      %vm1192 = vcmask 130048
      %v1193 = vsel %vm1192, %v1191, %v1185
      %vm1194 = vcmask 195584
      %v1195 = vsel %vm1194, %v1193, %v1189
      %v1196 = vpack.c.bf16 %v1195, %v1195
      %v1197 = vld [vmem:[%s10] sm:$0xf]
      %v1198 = vld [vmem:[%s10 + $0x4] sm:$0xf]
      %v1199 = vld [vmem:[%s10 + $0x8] sm:$0xf]
      %v1200 = vld [vmem:[%s10 + $0xc] sm:$0xf]
      %v1205 = vunpack.c.l.b16 %v1197
      %v1206 = vunpack.c.l.b16 %v1198
      %v1207 = vunpack.c.l.b16 %v1199
      %v1208 = vunpack.c.l.b16 %v1200
      %v1209 = vpack.c.b16 %v1206, %v1205
      %v1210 = vpack.c.b16 %v1208, %v1207
      %vm1213 = vcmask 261120
      %v1215 = vsel %vm1213, %v1196, 0
      %1217 = vmatpush.bf16.msra.mxu0 0
      %1218 = vmatpush.bf16.msra.mxu0 0
      %1219 = vmatpush.bf16.msra.mxu0 0
      %1220 = vmatpush.bf16.msra.mxu0 0
      %1221 = vmatpush.bf16.msra.mxu0 0
      %1222 = vmatpush.bf16.msra.mxu0 0
      %1223 = vmatpush.bf16.msra.mxu0 %v1210
      %1224 = vmatpush.bf16.msra.mxu0 %v1209
      %1225 = vmatmul.bf16.gmra.mxu0 %v1215
      %v1226 = vpop.f32.mrf.mxu0
      %v1227 = vadd.f32 0.0, %v1226
      %v1228 = vpop.f32.mrf.mxu0
      %1229 = vdwg.mxu0
      %v1230 = vadd.f32 %v669, %v1227
      %v1231 = vld [vmem:[%s11] sm:$0x1]
      %v1233 = vperm.slane %v1231, 0
      %v1235 = vadd.f32 %v1230, %v1233
      %v1236 = vsel %vm673, %v1235, 0.0
      %1237 = vadd.xlane.f32.xlu0 %v1236
      %v1238 = vpop.xlane.xlu0 %1237
      %v1239 = vmul.f32 %v1238, 0.03125
      %v1240 = vsub.f32 %v1235, %v1239
      %v1241 = vmul.f32 %v1240, %v672
      %v1242 = vmul.f32 %v1241, %v1241
      %v1243 = vsel %vm673, %v1242, 0.0
      %1244 = vadd.xlane.f32.xlu0 %v1243
      %v1245 = vpop.xlane.xlu0 %1244
      %v1246 = vmul.f32 %v1245, 0.03125
      %v1247 = vadd.f32 %v1246, 1e-05
      %v1248 = vrsqrt.pop %v1247
      %v1249 = vmul.f32 %v1248, %v1247
      %v1250 = vmul.f32 %v1249, %v1248
      %v1251 = vmul.f32 0.5, %v1250
      %v1252 = vsub.f32 1.5, %v1251
      %v1253 = vmul.f32 %v1248, %v1252
      %vm1254 = vweird.f32 %v1247
      %vm1255 = vweird.f32 %v1248
      %vm1256 = vmor %vm1254, %vm1255
      %v1257 = vsel %vm1256, %v1248, %v1253
      %v1258 = vmul.f32 %v1241, %v1257
      %v1259 = vld [vmem:[%s12] sm:$0x1]
      %v1261 = vperm.slane %v1259, 0
      %v1263 = vmul.f32 %v1258, %v1261
      %v1264 = vld [vmem:[%s13] sm:$0x1]
      %v1266 = vperm.slane %v1264, 0
      %v1268 = vadd.f32 %v1263, %v1266
      %v1269 = vpack.c.bf16 %v1268, %v1268
      %v1270 = vld [vmem:[%s14] sm:$0xf]
      %v1271 = vld [vmem:[%s14 + $0x4] sm:$0xf]
      %v1272 = vld [vmem:[%s14 + $0x8] sm:$0xf]
      %v1273 = vld [vmem:[%s14 + $0xc] sm:$0xf]
      %v1274 = vld [vmem:[%s14 + $0x10] sm:$0xf]
      %v1275 = vld [vmem:[%s14 + $0x14] sm:$0xf]
      %v1276 = vld [vmem:[%s14 + $0x18] sm:$0xf]
      %v1277 = vld [vmem:[%s14 + $0x1c] sm:$0xf]
      %v1278 = vld [vmem:[%s14 + $0x20] sm:$0xf]
      %v1279 = vld [vmem:[%s14 + $0x24] sm:$0xf]
      %v1280 = vld [vmem:[%s14 + $0x28] sm:$0xf]
      %v1281 = vld [vmem:[%s14 + $0x2c] sm:$0xf]
      %v1282 = vld [vmem:[%s14 + $0x30] sm:$0xf]
      %v1283 = vld [vmem:[%s14 + $0x34] sm:$0xf]
      %v1284 = vld [vmem:[%s14 + $0x38] sm:$0xf]
      %v1285 = vld [vmem:[%s14 + $0x3c] sm:$0xf]
      %v1286 = vld [vmem:[%s15] sm:$0x1]
      %v1288 = vperm.slane %v1286, 0
      %v1306 = vunpack.c.l.b16 %v1270
      %v1307 = vunpack.c.l.b16 %v1271
      %v1308 = vunpack.c.l.b16 %v1272
      %v1309 = vunpack.c.l.b16 %v1273
      %v1310 = vunpack.c.l.b16 %v1274
      %v1311 = vunpack.c.l.b16 %v1275
      %v1312 = vunpack.c.l.b16 %v1276
      %v1313 = vunpack.c.l.b16 %v1277
      %v1314 = vunpack.c.l.b16 %v1278
      %v1315 = vunpack.c.l.b16 %v1279
      %v1316 = vunpack.c.l.b16 %v1280
      %v1317 = vunpack.c.l.b16 %v1281
      %v1318 = vunpack.c.l.b16 %v1282
      %v1319 = vunpack.c.l.b16 %v1283
      %v1320 = vunpack.c.l.b16 %v1284
      %v1321 = vunpack.c.l.b16 %v1285
      %v1322 = vpack.c.b16 %v1307, %v1306
      %v1323 = vpack.c.b16 %v1309, %v1308
      %v1324 = vpack.c.b16 %v1311, %v1310
      %v1325 = vpack.c.b16 %v1313, %v1312
      %v1326 = vpack.c.b16 %v1315, %v1314
      %v1327 = vpack.c.b16 %v1317, %v1316
      %v1328 = vpack.c.b16 %v1319, %v1318
      %v1329 = vpack.c.b16 %v1321, %v1320
      %1338 = vmatpush.bf16.msra.mxu0 %v1329
      %1339 = vmatpush.bf16.msra.mxu0 %v1328
      %1340 = vmatpush.bf16.msra.mxu0 %v1327
      %1341 = vmatpush.bf16.msra.mxu0 %v1326
      %1342 = vmatpush.bf16.msra.mxu0 %v1325
      %1343 = vmatpush.bf16.msra.mxu0 %v1324
      %1344 = vmatpush.bf16.msra.mxu0 %v1323
      %1345 = vmatpush.bf16.msra.mxu0 %v1322
      %1346 = vmatmul.bf16.gmra.mxu0 %v1269
      %v1347 = vpop.f32.mrf.mxu0
      %v1348 = vadd.f32 %v1288, %v1347
      %v1349 = vpop.f32.mrf.mxu0
      %1350 = vdwg.mxu0
      %v1351 = vmax.f32 %v1348, 0.0
      %v1352 = vpack.c.bf16 %v1351, %v1351
      %v1353 = vld [vmem:[%s16] sm:$0xf]
      %v1354 = vld [vmem:[%s16 + $0x4] sm:$0xf]
      %v1355 = vld [vmem:[%s16 + $0x8] sm:$0xf]
      %v1356 = vld [vmem:[%s16 + $0xc] sm:$0xf]
      %v1357 = vld [vmem:[%s16 + $0x10] sm:$0xf]
      %v1358 = vld [vmem:[%s16 + $0x14] sm:$0xf]
      %v1359 = vld [vmem:[%s16 + $0x18] sm:$0xf]
      %v1360 = vld [vmem:[%s16 + $0x1c] sm:$0xf]
      %v1369 = vunpack.c.l.b16 %v1353
      %v1370 = vunpack.c.l.b16 %v1354
      %v1371 = vunpack.c.l.b16 %v1355
      %v1372 = vunpack.c.l.b16 %v1356
      %v1373 = vunpack.c.l.b16 %v1357
      %v1374 = vunpack.c.l.b16 %v1358
      %v1375 = vunpack.c.l.b16 %v1359
      %v1376 = vunpack.c.l.b16 %v1360
      %v1377 = vpack.c.b16 %v1370, %v1369
      %v1378 = vpack.c.b16 %v1372, %v1371
      %v1379 = vpack.c.b16 %v1374, %v1373
      %v1380 = vpack.c.b16 %v1376, %v1375
      %vm1385 = vcmask 523264
      %v1387 = vsel %vm1385, %v1352, 0
      %1389 = vmatpush.bf16.msra.mxu0 0
      %1390 = vmatpush.bf16.msra.mxu0 0
      %1391 = vmatpush.bf16.msra.mxu0 0
      %1392 = vmatpush.bf16.msra.mxu0 0
      %1393 = vmatpush.bf16.msra.mxu0 %v1380
      %1394 = vmatpush.bf16.msra.mxu0 %v1379
      %1395 = vmatpush.bf16.msra.mxu0 %v1378
      %1396 = vmatpush.bf16.msra.mxu0 %v1377
      %1397 = vmatmul.bf16.gmra.mxu0 %v1387
      %v1398 = vpop.f32.mrf.mxu0
      %v1399 = vadd.f32 0.0, %v1398
      %v1400 = vpop.f32.mrf.mxu0
      %1401 = vdwg.mxu0
      %v1402 = vadd.f32 %v1235, %v1399
      %v1403 = vld [vmem:[%s17] sm:$0x1]
      %v1405 = vperm.slane %v1403, 0
      %v1407 = vadd.f32 %v1402, %v1405
      %v1408 = vsel %vm673, %v1407, 0.0
      %1409 = vadd.xlane.f32.xlu0 %v1408
      %v1410 = vpop.xlane.xlu0 %1409
      %v1411 = vmul.f32 %v1410, 0.03125
      %v1412 = vsub.f32 %v1407, %v1411
      %v1413 = vmul.f32 %v1412, %v672
      %v1414 = vmul.f32 %v1413, %v1413
      %v1415 = vsel %vm673, %v1414, 0.0
      %1416 = vadd.xlane.f32.xlu0 %v1415
      %v1417 = vpop.xlane.xlu0 %1416
      %v1418 = vmul.f32 %v1417, 0.03125
      %v1419 = vadd.f32 %v1418, 1e-05
      %v1420 = vrsqrt.pop %v1419
      %v1421 = vmul.f32 %v1420, %v1419
      %v1422 = vmul.f32 %v1421, %v1420
      %v1423 = vmul.f32 0.5, %v1422
      %v1424 = vsub.f32 1.5, %v1423
      %v1425 = vmul.f32 %v1420, %v1424
      %vm1426 = vweird.f32 %v1419
      %vm1427 = vweird.f32 %v1420
      %vm1428 = vmor %vm1426, %vm1427
      %v1429 = vsel %vm1428, %v1420, %v1425
      %v1430 = vmul.f32 %v1413, %v1429
      %v1431 = vld [vmem:[%s18] sm:$0x1]
      %v1433 = vperm.slane %v1431, 0
      %v1435 = vmul.f32 %v1430, %v1433
      %v1436 = vld [vmem:[%s19] sm:$0x1]
      %v1438 = vperm.slane %v1436, 0
      %v1440 = vadd.f32 %v1435, %v1438
      %v1441 = vpack.c.bf16 %v1440, %v1440
      %v1442 = vld [vmem:[%s20] sm:$0xf]
      %v1443 = vld [vmem:[%s20 + $0x4] sm:$0xf]
      %v1444 = vld [vmem:[%s20 + $0x8] sm:$0xf]
      %v1445 = vld [vmem:[%s20 + $0xc] sm:$0xf]
      %v1446 = vld [vmem:[%s20 + $0x10] sm:$0xf]
      %v1447 = vld [vmem:[%s20 + $0x14] sm:$0xf]
      %v1448 = vld [vmem:[%s20 + $0x18] sm:$0xf]
      %v1449 = vld [vmem:[%s20 + $0x1c] sm:$0xf]
      %v1450 = vld [vmem:[%s20 + $0x20] sm:$0xf]
      %v1451 = vld [vmem:[%s20 + $0x24] sm:$0xf]
      %v1452 = vld [vmem:[%s20 + $0x28] sm:$0xf]
      %v1453 = vld [vmem:[%s20 + $0x2c] sm:$0xf]
      %v1454 = vld [vmem:[%s20 + $0x30] sm:$0xf]
      %v1455 = vld [vmem:[%s20 + $0x34] sm:$0xf]
      %v1456 = vld [vmem:[%s20 + $0x38] sm:$0xf]
      %v1457 = vld [vmem:[%s20 + $0x3c] sm:$0xf]
      %v1458 = vld [vmem:[%s21] sm:$0x1]
      %v1460 = vperm.slane %v1458, 0
      %v1478 = vunpack.c.l.b16 %v1442
      %v1479 = vunpack.c.l.b16 %v1443
      %v1480 = vunpack.c.l.b16 %v1444
      %v1481 = vunpack.c.l.b16 %v1445
      %v1482 = vunpack.c.l.b16 %v1446
      %v1483 = vunpack.c.l.b16 %v1447
      %v1484 = vunpack.c.l.b16 %v1448
      %v1485 = vunpack.c.l.b16 %v1449
      %v1486 = vunpack.c.l.b16 %v1450
      %v1487 = vunpack.c.l.b16 %v1451
      %v1488 = vunpack.c.l.b16 %v1452
      %v1489 = vunpack.c.l.b16 %v1453
      %v1490 = vunpack.c.l.b16 %v1454
      %v1491 = vunpack.c.l.b16 %v1455
      %v1492 = vunpack.c.l.b16 %v1456
      %v1493 = vunpack.c.l.b16 %v1457
      %v1494 = vpack.c.b16 %v1479, %v1478
      %v1495 = vpack.c.b16 %v1481, %v1480
      %v1496 = vpack.c.b16 %v1483, %v1482
      %v1497 = vpack.c.b16 %v1485, %v1484
      %v1498 = vpack.c.b16 %v1487, %v1486
      %v1499 = vpack.c.b16 %v1489, %v1488
      %v1500 = vpack.c.b16 %v1491, %v1490
      %v1501 = vpack.c.b16 %v1493, %v1492
      %1510 = vmatpush.bf16.msra.mxu0 %v1501
      %1511 = vmatpush.bf16.msra.mxu0 %v1500
      %1512 = vmatpush.bf16.msra.mxu0 %v1499
      %1513 = vmatpush.bf16.msra.mxu0 %v1498
      %1514 = vmatpush.bf16.msra.mxu0 %v1497
      %1515 = vmatpush.bf16.msra.mxu0 %v1496
      %1516 = vmatpush.bf16.msra.mxu0 %v1495
      %1517 = vmatpush.bf16.msra.mxu0 %v1494
      %1518 = vmatmul.bf16.gmra.mxu0 %v1441
      %v1519 = vpop.f32.mrf.mxu0
      %v1520 = vadd.f32 %v1460, %v1519
      %v1521 = vpop.f32.mrf.mxu0
      %1522 = vdwg.mxu0
      %v1523 = vpack.c.bf16 %v1520, %v1520
      %1524 = vst [vmem:[%s660] sm:$0x7] %v1523
      %p1525 = scmp.lt.s32.totalorder %s41, 1
      %s1526 = scalar_select %p1525, %s41, 1
      %s1527 = smul.addr %s1526, 4
      %s1528 = scalar_lea.vmem %s22, %s1527
      // Predicated region
      $region105: #{tpu_custom_call.1} parent=103 // pred_check
        %p1529 = pneg %p505
      $region106: #{tpu_custom_call.1} parent=103 // pred_check_branch
        %1531 = sbr.rel (%p1529) target = $region108
      $region107: #{tpu_custom_call.1} parent=103 // pred_region
        _
      $region108: #{tpu_custom_call.1} parent=103 // pred_fallthru
        _
    $region104: #{tpu_custom_call.1} parent=5 // pred_fallthru
      _
    %p1532 = scmp.le.s32.totalorder 2, %s36
    // Predicated region
    $region109: #{tpu_custom_call.1} parent=5 // pred_check
      %p1533 = pneg %p1532
    $region110: #{tpu_custom_call.1} parent=5 // pred_check_branch
      %1535 = sbr.rel (%p1533) target = $region112
    $region111: #{tpu_custom_call.1} parent=5 // pred_region
      %s1536 = ssub.s32 %s36, 2
      // Predicated region
      $region113: #{tpu_custom_call.1} parent=111 // pred_check
        %p1537 = pneg %p511
      $region114: #{tpu_custom_call.1} parent=111 // pred_check_branch
        %1539 = sbr.rel (%p1537) target = $region116
      $region115: #{tpu_custom_call.1} parent=111 // pred_region
        %p1540 = scmp.lt.s32.totalorder %s42, 1
        %s1541 = scalar_select %p1540, %s42, 1
        %s1542 = smul.addr %s1541, 4
        %s1543 = scalar_lea.vmem %s22, %s1542
      $region116: #{tpu_custom_call.1} parent=111 // pred_fallthru
        _
    $region112: #{tpu_custom_call.1} parent=5 // pred_fallthru
      _
  $region6: #{tpu_custom_call.1} parent=0 // loop_footer
    %s40 = sadd.s32 1, %s36
  $region7: #{tpu_custom_call.1} parent=0 // loop_footer_branch
    %35 = sbr.rel target = $region3
  $region8: #{tpu_custom_call.1} parent=0 // loop_exit
    _

</llo_original>
